<compile_context>
chip_gen: v7x
topology: tpu7x:2x2x1
jax: 0.10.0
libtpu: 0.0.40
codegen_flags: <defaults>
</compile_context>

<pallas_src>
import jax
import jax.numpy as jnp
import numpy as np
from jax.experimental import pallas as pl
from jax.experimental.pallas import tpu as pltpu

# ----------------------------- model config (small) -----------------------------
B, L, D = 2, 8, 32          # batch, seq len, model dim
BL = B * L                  # flattened tokens
N_HEADS = 4                 # n_kv_heads == n_heads (ModelArgs.n_kv_heads = None)
D_HEAD = D // N_HEADS
FFN_HIDDEN = 64
NORM_EPS = 1e-6
NEG_INF = -1e30

# ------------------------- packed constant-slab row layout -----------------------
QKV_ROWS = 2 * D + N_HEADS * D           # 192: [Q*scale ; K ; per-head Wo_h@Wv_h]
R_WATT = 0                               # (192, D)   fused attn weight (g1 folded)
R_CATT = R_WATT + QKV_ROWS               # (192, BL)  W_qkv @ pe^T + bias (per token)
R_WGU  = R_CATT + QKV_ROWS               # (D, 2*FFN) fused gate|up weight (g2 folded)
R_WD   = R_WGU + D                       # (FFN, D)   down-proj weight
R_MASK = R_WD + FFN_HIDDEN               # (BL, BL)   additive block-causal mask
SLAB_ROWS = R_MASK + BL                  # 496  (multiple of 8)


# ----------------------------------- kernel ------------------------------------
def encoder_block_kernel(x_ref, w_ref, out_ref):
    x = x_ref[...]                                           # (BL, D) residual stream

    # Static, sublane-aligned views into the packed constant slab (free).
    w_att  = w_ref[R_WATT:R_WATT + QKV_ROWS, :D]             # (192, D)
    c_att  = w_ref[R_CATT:R_CATT + QKV_ROWS, :BL]            # (192, BL)
    w_gu   = w_ref[R_WGU:R_WGU + D, :2 * FFN_HIDDEN]         # (D, 128)
    w_down = w_ref[R_WD:R_WD + FFN_HIDDEN, :D]               # (FFN, D)
    mask   = w_ref[R_MASK:R_MASK + BL, :BL]                  # (BL, BL)

    def rms(v):  # gamma is folded into the following weight matrix
        return v * jax.lax.rsqrt(jnp.mean(v * v, axis=-1, keepdims=True) + NORM_EPS)

    # ---------------- self-attention branch ----------------
    # Fused projection in transposed (feature-major) space: rows of `qkv` are output
    # features, columns are flat tokens.  PE + bias already live in c_att.
    n1 = rms(x)                                              # (BL, D)
    qkv = jnp.dot(w_att, n1.T,
                  preferred_element_type=jnp.float32) + c_att        # (192, BL)

    qT = qkv[0:D].reshape(N_HEADS, D_HEAD, BL)               # (H, dh, BL)
    kT = qkv[D:2 * D].reshape(N_HEADS, D_HEAD, BL)           # (H, dh, BL)
    vT = qkv[2 * D:].reshape(N_HEADS, D, BL)                 # (H, D, BL)  V' = V@Wo_h^T

    q = jnp.transpose(qT, (0, 2, 1))                         # (H, BL, dh)
    v = jnp.transpose(vT, (0, 2, 1))                         # (H, BL, D)

    # Scores over all B*L token pairs; the precomputed additive mask enforces both
    # causality and batch separation (cross-batch pairs get -1e30 -> weight 0).
    s = jnp.einsum('hid,hdj->hij', q, kT,
                   preferred_element_type=jnp.float32)       # (H, BL, BL)
    s = s + mask
    s = s - jnp.max(s, axis=-1, keepdims=True)
    p = jnp.exp(s)
    p = p * pl.reciprocal(jnp.sum(p, axis=-1, keepdims=True), approx=True)

    o = jnp.einsum('hij,hjd->hid', p, v,
                   preferred_element_type=jnp.float32)       # (H, BL, D)
    x = x + jnp.sum(o, axis=0)                               # residual 1 (Wo folded in)

    # ---------------- SwiGLU MLP branch ----------------
    n2 = rms(x)
    gu = jnp.dot(n2, w_gu, preferred_element_type=jnp.float32)        # (BL, 128)
    g = gu[:, :FFN_HIDDEN]
    u = gu[:, FFN_HIDDEN:]
    ff = jnp.dot(g * jax.nn.sigmoid(g) * u, w_down,
                 preferred_element_type=jnp.float32)         # (BL, D)

    out_ref[...] = x + ff                                    # residual 2


# --------------------------------- wrapper --------------------------------------
def encoder_block(x, pe, g1, g2, wq, bq, wk, bk, wv, bv, wo, wg, wu, wd):
    """Host/XLA-side weight packing + single pallas_call."""
    scale = jnp.float32(1.0 / np.sqrt(D_HEAD))

    # Fused attention weight, output-feature-major rows:
    #   rows 0:D      -> scale*Wq          rows D:2D -> Wk
    #   rows 2D+h*D.. -> Wo[:, h*dh:(h+1)*dh] @ Wv[h*dh:(h+1)*dh, :]   (Wo folded into V)
    w_rows = [wq * scale, wk]
    b_rows = [(bq * scale).reshape(D), bk.reshape(D)]
    bv_flat = bv.reshape(D)
    for h in range(N_HEADS):
        wo_h = wo[:, h * D_HEAD:(h + 1) * D_HEAD]            # (D, dh)
        wv_h = wv[h * D_HEAD:(h + 1) * D_HEAD, :]            # (dh, D)
        w_rows.append(wo_h @ wv_h)                           # (D, D)
        b_rows.append(wo_h @ bv_flat[h * D_HEAD:(h + 1) * D_HEAD])    # (D,)
    w_att = jnp.concatenate(w_rows, axis=0)                  # (192, D)
    b_att = jnp.concatenate(b_rows, axis=0)                  # (192,)

    # Per-token additive constant: projection of the positional encoding + bias.
    pe_flat = jnp.tile(pe, (B, 1))                           # (BL, D)
    c_att = w_att @ pe_flat.T + b_att[:, None]               # (192, BL)
    w_att = w_att * g1.reshape(1, D)                         # fold input_layernorm gamma

    # MLP weights: fused gate|up (g2 folded into rows), transposed down-proj.
    wgu = jnp.concatenate([wg.T, wu.T], axis=1) * g2.reshape(D, 1)    # (D, 2*FFN)
    wd_t = wd.T                                              # (FFN, D)

    # Additive block-diagonal causal mask over flat token pairs.
    tok = np.arange(BL)
    allowed = ((tok[:, None] // L) == (tok[None, :] // L)) & (tok[None, :] <= tok[:, None])
    mask_add = jnp.asarray(np.where(allowed, 0.0, NEG_INF), jnp.float32)   # (BL, BL)

    # Pack everything into one lane-dense slab (one input DMA for all constants).
    slab = jnp.zeros((SLAB_ROWS, 128), jnp.float32)
    slab = slab.at[R_WATT:R_WATT + QKV_ROWS, :D].set(w_att)
    slab = slab.at[R_CATT:R_CATT + QKV_ROWS, :BL].set(c_att)
    slab = slab.at[R_WGU:R_WGU + D, :2 * FFN_HIDDEN].set(wgu)
    slab = slab.at[R_WD:R_WD + FFN_HIDDEN, :D].set(wd_t)
    slab = slab.at[R_MASK:R_MASK + BL, :BL].set(mask_add)

    out = pl.pallas_call(
        encoder_block_kernel,
        out_shape=jax.ShapeDtypeStruct((BL, D), jnp.float32),
        grid_spec=pltpu.PrefetchScalarGridSpec(
            num_scalar_prefetch=0,
            grid=(1,),                                       # single tiny invocation
            in_specs=[
                pl.BlockSpec((BL, D), lambda i: (0, 0)),             # x (flat tokens)
                pl.BlockSpec((SLAB_ROWS, 128), lambda i: (0, 0)),    # packed constants
            ],
            out_specs=pl.BlockSpec((BL, D), lambda i: (0, 0)),
        ),
        compiler_params=pltpu.CompilerParams(
            dimension_semantics=("arbitrary",)),
    )(x.reshape(BL, D), slab)
    return out.reshape(B, L, D)


# ------------------------------ pure-JAX reference -------------------------------
def reference(x, pe, g1, g2, wq, bq, wk, bk, wv, bv, wo, wg, wu, wd):
    def rms(v, g):
        ms = jnp.mean(v * v, axis=-1, keepdims=True)
        return v * jax.lax.rsqrt(ms + NORM_EPS) * g

    h = rms(x, g1) + pe[None]
    q = h @ wq.T + bq
    k = h @ wk.T + bk
    v = h @ wv.T + bv
    q = q.reshape(B, L, N_HEADS, D_HEAD).transpose(0, 2, 1, 3)
    k = k.reshape(B, L, N_HEADS, D_HEAD).transpose(0, 2, 1, 3)
    v = v.reshape(B, L, N_HEADS, D_HEAD).transpose(0, 2, 1, 3)
    s = jnp.einsum('bhld,bhmd->bhlm', q, k) / jnp.sqrt(jnp.float32(D_HEAD))
    mask = jnp.tril(jnp.ones((L, L), dtype=bool))
    s = jnp.where(mask, s, -jnp.inf)
    p = jax.nn.softmax(s, axis=-1)
    o = jnp.einsum('bhlm,bhmd->bhld', p, v).transpose(0, 2, 1, 3).reshape(B, L, D)
    x = x + o @ wo.T
    h2 = rms(x, g2)
    ff = (jax.nn.silu(h2 @ wg.T) * (h2 @ wu.T)) @ wd.T
    return x + ff


# ------------------------------------ main ---------------------------------------
if __name__ == "__main__":
    key = jax.random.PRNGKey(0)
    ks = jax.random.split(key, 14)

    x = jax.random.normal(ks[0], (B, L, D), jnp.float32)

    # sinusoidal positional encoding (standard transformer PE)
    pos = jnp.arange(L, dtype=jnp.float32)[:, None]
    div = jnp.exp(jnp.arange(0, D, 2, dtype=jnp.float32) * (-jnp.log(10000.0) / D))
    pe = jnp.zeros((L, D), jnp.float32)
    pe = pe.at[:, 0::2].set(jnp.sin(pos * div))
    pe = pe.at[:, 1::2].set(jnp.cos(pos * div))

    # parameters (non-trivial gammas to exercise the gamma folding)
    g1 = 1.0 + 0.1 * jax.random.normal(ks[11], (1, D), jnp.float32)
    g2 = 1.0 + 0.1 * jax.random.normal(ks[12], (1, D), jnp.float32)
    wq = 0.05 * jax.random.normal(ks[1], (D, D), jnp.float32)
    bq = 0.05 * jax.random.normal(ks[2], (1, D), jnp.float32)
    wk = 0.05 * jax.random.normal(ks[3], (D, D), jnp.float32)
    bk = 0.05 * jax.random.normal(ks[4], (1, D), jnp.float32)
    wv = 0.05 * jax.random.normal(ks[5], (D, D), jnp.float32)
    bv = 0.05 * jax.random.normal(ks[6], (1, D), jnp.float32)
    wo = 0.05 * jax.random.normal(ks[7], (D, D), jnp.float32)
    wg = 0.05 * jax.random.normal(ks[8], (FFN_HIDDEN, D), jnp.float32)
    wu = 0.05 * jax.random.normal(ks[9], (FFN_HIDDEN, D), jnp.float32)
    wd = 0.05 * jax.random.normal(ks[10], (D, FFN_HIDDEN), jnp.float32)

    out = encoder_block(x, pe, g1, g2, wq, bq, wk, bk, wv, bv, wo, wg, wu, wd)
    out = jax.block_until_ready(out)

    ref = reference(x, pe, g1, g2, wq, bq, wk, bk, wv, bv, wo, wg, wu, wd)
    ref = jax.block_until_ready(ref)

    np.testing.assert_allclose(np.asarray(out), np.asarray(ref),
                               rtol=1e-3, atol=1e-3)
    print("KERNEL_OK")
</pallas_src>

<mosaic_0001>
module attributes {stable_mosaic.version = 11 : i64} {
  func.func @encoder_block_kernel(%arg0: i32, %arg1: memref<16x32xf32, #tpu.memory_space<vmem>>, %arg2: memref<496x128xf32, #tpu.memory_space<vmem>>, %arg3: memref<16x32xf32, #tpu.memory_space<vmem>>) attributes {dimension_semantics = [#tpu.dimension_semantics<arbitrary>], iteration_bounds = array<i64: 1>, scalar_prefetch = 0 : i64, scratch_operands = 0 : i64, tpu.core_type = #tpu.core_type<tc>, window_params = [{pipeline_mode = #tpu.pipeline_mode<synchronous>, transform_indices = @transform_0, window_bounds = array<i64: 16, 32>}, {pipeline_mode = #tpu.pipeline_mode<synchronous>, transform_indices = @transform_1, window_bounds = array<i64: 496, 128>}, {pipeline_mode = #tpu.pipeline_mode<synchronous>, transform_indices = @transform_2, window_bounds = array<i64: 16, 32>}]} {
    %c0 = arith.constant 0 : index
    %c0_0 = arith.constant 0 : index
    %0 = vector.load %arg1[%c0, %c0_0] : memref<16x32xf32, #tpu.memory_space<vmem>>, vector<16x32xf32>
    %c0_1 = arith.constant 0 : index
    %c0_2 = arith.constant 0 : index
    %1 = vector.load %arg2[%c0_1, %c0_2] : memref<496x128xf32, #tpu.memory_space<vmem>>, vector<192x32xf32>
    %c192 = arith.constant 192 : index
    %c0_3 = arith.constant 0 : index
    %2 = vector.load %arg2[%c192, %c0_3] : memref<496x128xf32, #tpu.memory_space<vmem>>, vector<192x16xf32>
    %c384 = arith.constant 384 : index
    %c0_4 = arith.constant 0 : index
    %3 = vector.load %arg2[%c384, %c0_4] : memref<496x128xf32, #tpu.memory_space<vmem>>, vector<32x128xf32>
    %c416 = arith.constant 416 : index
    %c0_5 = arith.constant 0 : index
    %4 = vector.load %arg2[%c416, %c0_5] : memref<496x128xf32, #tpu.memory_space<vmem>>, vector<64x32xf32>
    %c480 = arith.constant 480 : index
    %c0_6 = arith.constant 0 : index
    %5 = vector.load %arg2[%c480, %c0_6] : memref<496x128xf32, #tpu.memory_space<vmem>>, vector<16x16xf32>
    %6 = arith.mulf %0, %0 : vector<16x32xf32>
    %cst = arith.constant dense<0.000000e+00> : vector<16xf32>
    %7 = vector.multi_reduction <add>, %6, %cst [1] : vector<16x32xf32> to vector<16xf32>
    %8 = vector.shape_cast %7 : vector<16xf32> to vector<16x1xf32>
    %cst_7 = arith.constant 3.200000e+01 : f32
    %9 = vector.broadcast %cst_7 : f32 to vector<16x1xf32>
    %10 = arith.divf %8, %9 : vector<16x1xf32>
    %cst_8 = arith.constant 9.99999997E-7 : f32
    %11 = vector.broadcast %cst_8 : f32 to vector<16x1xf32>
    %12 = arith.addf %10, %11 : vector<16x1xf32>
    %13 = math.rsqrt %12 : vector<16x1xf32>
    %14 = vector.broadcast %13 : vector<16x1xf32> to vector<16x32xf32>
    %15 = arith.mulf %0, %14 : vector<16x32xf32>
    %16 = tpu.transpose %15, [1, 0] : vector<16x32xf32> -> vector<32x16xf32>
    %cst_9 = arith.constant dense<0.000000e+00> : vector<192x16xf32>
    %17 = tpu.matmul %1, %16, %cst_9 {dimension_numbers = #tpu.dot_dimension_numbers<[1], [0], [0], [1], [0, 0, 1, 1], [], []>} : vector<192x32xf32>, vector<32x16xf32>, vector<192x16xf32> -> vector<192x16xf32>
    %18 = arith.addf %17, %2 : vector<192x16xf32>
    %19 = vector.extract_strided_slice %18 {offsets = [0, 0], sizes = [32, 16], strides = [1, 1]} : vector<192x16xf32> to vector<32x16xf32>
    %20 = vector.shape_cast %19 : vector<32x16xf32> to vector<4x8x16xf32>
    %21 = vector.extract_strided_slice %18 {offsets = [32, 0], sizes = [32, 16], strides = [1, 1]} : vector<192x16xf32> to vector<32x16xf32>
    %22 = vector.shape_cast %21 : vector<32x16xf32> to vector<4x8x16xf32>
    %23 = vector.extract_strided_slice %18 {offsets = [64, 0], sizes = [128, 16], strides = [1, 1]} : vector<192x16xf32> to vector<128x16xf32>
    %24 = vector.shape_cast %23 : vector<128x16xf32> to vector<4x32x16xf32>
    %25 = tpu.transpose %20, [0, 2, 1] : vector<4x8x16xf32> -> vector<4x16x8xf32>
    %26 = tpu.transpose %24, [0, 2, 1] : vector<4x32x16xf32> -> vector<4x16x32xf32>
    "tpu.trace_start"() <{level = 10 : i32, message = "hid,hdj->hij"}> : () -> ()
    %cst_10 = arith.constant dense<0.000000e+00> : vector<4x16x16xf32>
    %27 = tpu.matmul %25, %22, %cst_10 {dimension_numbers = #tpu.dot_dimension_numbers<[2], [1], [1], [2], [0, 0, 0, 1, 1, 2], [0], [0]>} : vector<4x16x8xf32>, vector<4x8x16xf32>, vector<4x16x16xf32> -> vector<4x16x16xf32>
    "tpu.trace_stop"() : () -> ()
    %28 = vector.shape_cast %5 : vector<16x16xf32> to vector<1x16x16xf32>
    %29 = vector.broadcast %28 : vector<1x16x16xf32> to vector<4x16x16xf32>
    %30 = arith.addf %27, %29 : vector<4x16x16xf32>
    %cst_11 = arith.constant dense<0xFF800000> : vector<4x16xf32>
    %31 = vector.multi_reduction <maximumf>, %30, %cst_11 [2] : vector<4x16x16xf32> to vector<4x16xf32>
    %32 = vector.shape_cast %31 : vector<4x16xf32> to vector<4x16x1xf32>
    %33 = vector.broadcast %32 : vector<4x16x1xf32> to vector<4x16x16xf32>
    %34 = arith.subf %30, %33 : vector<4x16x16xf32>
    %35 = math.exp %34 : vector<4x16x16xf32>
    %cst_12 = arith.constant dense<0.000000e+00> : vector<4x16xf32>
    %36 = vector.multi_reduction <add>, %35, %cst_12 [2] : vector<4x16x16xf32> to vector<4x16xf32>
    %37 = vector.shape_cast %36 : vector<4x16xf32> to vector<4x16x1xf32>
    %38 = tpu.reciprocal %37 {approx = true} : vector<4x16x1xf32> -> vector<4x16x1xf32>
    %39 = vector.broadcast %38 : vector<4x16x1xf32> to vector<4x16x16xf32>
    %40 = arith.mulf %35, %39 : vector<4x16x16xf32>
    "tpu.trace_start"() <{level = 10 : i32, message = "hij,hjd->hid"}> : () -> ()
    %cst_13 = arith.constant dense<0.000000e+00> : vector<4x16x32xf32>
    %41 = tpu.matmul %40, %26, %cst_13 {dimension_numbers = #tpu.dot_dimension_numbers<[2], [1], [1], [2], [0, 0, 0, 1, 1, 2], [0], [0]>} : vector<4x16x16xf32>, vector<4x16x32xf32>, vector<4x16x32xf32> -> vector<4x16x32xf32>
    "tpu.trace_stop"() : () -> ()
    %cst_14 = arith.constant dense<0.000000e+00> : vector<16x32xf32>
    %42 = vector.multi_reduction <add>, %41, %cst_14 [0] : vector<4x16x32xf32> to vector<16x32xf32>
    %43 = arith.addf %0, %42 : vector<16x32xf32>
    %44 = arith.mulf %43, %43 : vector<16x32xf32>
    %cst_15 = arith.constant dense<0.000000e+00> : vector<16xf32>
    %45 = vector.multi_reduction <add>, %44, %cst_15 [1] : vector<16x32xf32> to vector<16xf32>
    %46 = vector.shape_cast %45 : vector<16xf32> to vector<16x1xf32>
    %cst_16 = arith.constant 3.200000e+01 : f32
    %47 = vector.broadcast %cst_16 : f32 to vector<16x1xf32>
    %48 = arith.divf %46, %47 : vector<16x1xf32>
    %cst_17 = arith.constant 9.99999997E-7 : f32
    %49 = vector.broadcast %cst_17 : f32 to vector<16x1xf32>
    %50 = arith.addf %48, %49 : vector<16x1xf32>
    %51 = math.rsqrt %50 : vector<16x1xf32>
    %52 = vector.broadcast %51 : vector<16x1xf32> to vector<16x32xf32>
    %53 = arith.mulf %43, %52 : vector<16x32xf32>
    %cst_18 = arith.constant dense<0.000000e+00> : vector<16x128xf32>
    %54 = tpu.matmul %53, %3, %cst_18 {dimension_numbers = #tpu.dot_dimension_numbers<[1], [0], [0], [1], [0, 0, 1, 1], [], []>} : vector<16x32xf32>, vector<32x128xf32>, vector<16x128xf32> -> vector<16x128xf32>
    %55 = vector.extract_strided_slice %54 {offsets = [0, 0], sizes = [16, 64], strides = [1, 1]} : vector<16x128xf32> to vector<16x64xf32>
    %56 = vector.extract_strided_slice %54 {offsets = [0, 64], sizes = [16, 64], strides = [1, 1]} : vector<16x128xf32> to vector<16x64xf32>
    %57 = arith.negf %55 : vector<16x64xf32>
    %58 = math.exp %57 : vector<16x64xf32>
    %cst_19 = arith.constant 1.000000e+00 : f32
    %59 = vector.broadcast %cst_19 : f32 to vector<16x64xf32>
    %60 = arith.addf %59, %58 : vector<16x64xf32>
    %61 = arith.divf %59, %60 : vector<16x64xf32>
    %62 = arith.mulf %55, %61 : vector<16x64xf32>
    %63 = arith.mulf %62, %56 : vector<16x64xf32>
    %cst_20 = arith.constant dense<0.000000e+00> : vector<16x32xf32>
    %64 = tpu.matmul %63, %4, %cst_20 {dimension_numbers = #tpu.dot_dimension_numbers<[1], [0], [0], [1], [0, 0, 1, 1], [], []>} : vector<16x64xf32>, vector<64x32xf32>, vector<16x32xf32> -> vector<16x32xf32>
    %65 = arith.addf %43, %64 : vector<16x32xf32>
    %c0_21 = arith.constant 0 : index
    %c0_22 = arith.constant 0 : index
    %66 = vector.load %arg3[%c0_21, %c0_22] : memref<16x32xf32, #tpu.memory_space<vmem>>, vector<16x32xf32>
    tpu.vector_store %arg3[%c0_21, %c0_22], %65 {strides = array<i32>} : memref<16x32xf32, #tpu.memory_space<vmem>>, vector<16x32xf32>,
    return
  }
  func.func @transform_0(%arg0: i32) -> (i32, i32) {
    %c0_i32 = arith.constant 0 : i32
    %c0_i32_0 = arith.constant 0 : i32
    %c0_i32_1 = arith.constant 0 : i32
    return %c0_i32, %c0_i32_0 : i32, i32
  }
  func.func @transform_1(%arg0: i32) -> (i32, i32) {
    %c0_i32 = arith.constant 0 : i32
    %c0_i32_0 = arith.constant 0 : i32
    %c0_i32_1 = arith.constant 0 : i32
    return %c0_i32, %c0_i32_0 : i32, i32
  }
  func.func @transform_2(%arg0: i32) -> (i32, i32) {
    %c0_i32 = arith.constant 0 : i32
    %c0_i32_0 = arith.constant 0 : i32
    %c0_i32_1 = arith.constant 0 : i32
    return %c0_i32, %c0_i32_0 : i32, i32
  }
}

</mosaic_0001>

<llo_original>
// kernel: tpu_custom_call.1
$region0: #{tpu_custom_call.1}
  #allocation0 [shape = 'u32[]', space=smem, size = 0x4, offset = 0x4, fixed_abs, tag = 'smem constant byte address 0x4 - core index']
  #allocation1 [shape = 'u32[144,128]{1,0:T(1,128)}', space=vmem, size = 0x12000, scoped, tag = 'internal scratch']
  %s0 = inlined_call_operand.hbm [shape: f32[16,32], index: 0, kind: input, shape index: {}]
  %s1 = inlined_call_operand.hbm [shape: f32[496,128], index: 1, kind: input, shape index: {}]
  %s2 = inlined_call_operand.hbm [shape: f32[16,32], index: 2, kind: output, shape index: {}]
  %s3 = sld [smem:[#allocation0]]
  $region26: #{tpu_custom_call.1} parent=0
    _
  %s5 = ssub.s32 1, %s3
  %s6 = scalar_select 0, %s5, %s3
  $region1: #{tpu_custom_call.1} parent=0
    #allocation2 [shape = 'u8[8192]{0}', space=vmem, size = 0x2000, scoped, tag = 'input window, operand 0, single buffered']
    #allocation3 [shape = 's32[1]{0}', space=sflag, size = 0x4, scoped, tag = 'scoped memory for tpu_custom_call.1']
    #allocation4 [shape = 's32[1]{0}', space=sflag, size = 0x4, scoped, tag = 'scoped memory for tpu_custom_call.1']
    #allocation5 [shape = 'u8[253952]{0}', space=vmem, size = 0x3e000, scoped, tag = 'input window, operand 1, single buffered']
    #allocation6 [shape = 's32[1]{0}', space=sflag, size = 0x4, scoped, tag = 'scoped memory for tpu_custom_call.1']
    #allocation7 [shape = 'u8[8192]{0}', space=vmem, size = 0x2000, scoped, tag = 'output window, operand 0, single buffered']
    %7 = vsyncpa [#allocation3], 0
    %8 = vsyncpa [#allocation6], 0
    %9 = vsyncpa [#allocation4], 0
    // Predicated region
    $region2: #{tpu_custom_call.1} parent=1 // pred_check
      _
    $region3: #{tpu_custom_call.1} parent=1 // pred_check_branch
      %11 = sbr.rel (0) target = $region5
    $region4: #{tpu_custom_call.1} parent=1 // pred_region
      %s13 = ssub.s32 256, 256
      %14 = vsyncadd [#allocation3], %s13
      %s15 = sshll.u32 [#allocation2], 4
      %s16 = int_to_ptr.vmem [resolvable:$true] %s15
      %21 = dma.hbm_to_vmem [thread:$0]  %s0, 256, %s16, [#allocation3], 128, 128, 8
    $region5: #{tpu_custom_call.1} parent=1 // pred_fallthru
      _
    // Predicated region
    $region6: #{tpu_custom_call.1} parent=1 // pred_check
      _
    $region7: #{tpu_custom_call.1} parent=1 // pred_check_branch
      %23 = sbr.rel (0) target = $region9
    $region8: #{tpu_custom_call.1} parent=1 // pred_region
      %s25 = ssub.s32 7936, 7936
      %26 = vsyncadd [#allocation6], %s25
      %s27 = sshll.u32 [#allocation5], 4
      %s28 = int_to_ptr.vmem [resolvable:$true] %s27
      %33 = dma.hbm_to_vmem [thread:$0]  %s1, 7936, %s28, [#allocation6], 128, 128, 8
    $region9: #{tpu_custom_call.1} parent=1 // pred_fallthru
      _
    // Predicated region
    $region10: #{tpu_custom_call.1} parent=1 // pred_check
      _
    $region11: #{tpu_custom_call.1} parent=1 // pred_check_branch
      %35 = sbr.rel (0) target = $region13
    $region12: #{tpu_custom_call.1} parent=1 // pred_region
      %36 = dma.done [#allocation3], 256
    $region13: #{tpu_custom_call.1} parent=1 // pred_fallthru
      _
    // Predicated region
    $region14: #{tpu_custom_call.1} parent=1 // pred_check
      _
    $region15: #{tpu_custom_call.1} parent=1 // pred_check_branch
      %38 = sbr.rel (0) target = $region17
    $region16: #{tpu_custom_call.1} parent=1 // pred_region
      %39 = dma.done [#allocation6], 7936
    $region17: #{tpu_custom_call.1} parent=1 // pred_fallthru
      _
    %v40 = vld [vmem:[#allocation2] sm:$0xff]
    %v41 = vld [vmem:[#allocation2 + $0x8] sm:$0xff]
    %v42 = vld [vmem:[#allocation5] sm:$0xff]
    %v43 = vld [vmem:[#allocation5 + $0x8] sm:$0xff]
    %v44 = vld [vmem:[#allocation5 + $0x10] sm:$0xff]
    %v45 = vld [vmem:[#allocation5 + $0x18] sm:$0xff]
    %v46 = vld [vmem:[#allocation5 + $0x20] sm:$0xff]
    %v47 = vld [vmem:[#allocation5 + $0x28] sm:$0xff]
    %v48 = vld [vmem:[#allocation5 + $0x30] sm:$0xff]
    %v49 = vld [vmem:[#allocation5 + $0x38] sm:$0xff]
    %v50 = vld [vmem:[#allocation5 + $0x40] sm:$0xff]
    %v51 = vld [vmem:[#allocation5 + $0x48] sm:$0xff]
    %v52 = vld [vmem:[#allocation5 + $0x50] sm:$0xff]
    %v53 = vld [vmem:[#allocation5 + $0x58] sm:$0xff]
    %v54 = vld [vmem:[#allocation5 + $0x60] sm:$0xff]
    %v55 = vld [vmem:[#allocation5 + $0x68] sm:$0xff]
    %v56 = vld [vmem:[#allocation5 + $0x70] sm:$0xff]
    %v57 = vld [vmem:[#allocation5 + $0x78] sm:$0xff]
    %v58 = vld [vmem:[#allocation5 + $0x80] sm:$0xff]
    %v59 = vld [vmem:[#allocation5 + $0x88] sm:$0xff]
    %v60 = vld [vmem:[#allocation5 + $0x90] sm:$0xff]
    %v61 = vld [vmem:[#allocation5 + $0x98] sm:$0xff]
    %v62 = vld [vmem:[#allocation5 + $0xa0] sm:$0xff]
    %v63 = vld [vmem:[#allocation5 + $0xa8] sm:$0xff]
    %v64 = vld [vmem:[#allocation5 + $0xb0] sm:$0xff]
    %v65 = vld [vmem:[#allocation5 + $0xb8] sm:$0xff]
    %v66 = vld [vmem:[#allocation5 + $0xc0] sm:$0xff]
    %v67 = vld [vmem:[#allocation5 + $0xc8] sm:$0xff]
    %v68 = vld [vmem:[#allocation5 + $0xd0] sm:$0xff]
    %v69 = vld [vmem:[#allocation5 + $0xd8] sm:$0xff]
    %v70 = vld [vmem:[#allocation5 + $0xe0] sm:$0xff]
    %v71 = vld [vmem:[#allocation5 + $0xe8] sm:$0xff]
    %v72 = vld [vmem:[#allocation5 + $0xf0] sm:$0xff]
    %v73 = vld [vmem:[#allocation5 + $0xf8] sm:$0xff]
    %v74 = vld [vmem:[#allocation5 + $0x100] sm:$0xff]
    %v75 = vld [vmem:[#allocation5 + $0x108] sm:$0xff]
    %v76 = vld [vmem:[#allocation5 + $0x110] sm:$0xff]
    %v77 = vld [vmem:[#allocation5 + $0x118] sm:$0xff]
    %v78 = vld [vmem:[#allocation5 + $0x120] sm:$0xff]
    %v79 = vld [vmem:[#allocation5 + $0x128] sm:$0xff]
    %v80 = vld [vmem:[#allocation5 + $0x130] sm:$0xff]
    %v81 = vld [vmem:[#allocation5 + $0x138] sm:$0xff]
    %v82 = vld [vmem:[#allocation5 + $0x140] sm:$0xff]
    %v83 = vld [vmem:[#allocation5 + $0x148] sm:$0xff]
    %v84 = vld [vmem:[#allocation5 + $0x150] sm:$0xff]
    %v85 = vld [vmem:[#allocation5 + $0x158] sm:$0xff]
    %v86 = vld [vmem:[#allocation5 + $0x160] sm:$0xff]
    %v87 = vld [vmem:[#allocation5 + $0x168] sm:$0xff]
    %v88 = vld [vmem:[#allocation5 + $0x170] sm:$0xff]
    %v89 = vld [vmem:[#allocation5 + $0x178] sm:$0xff]
    %v90 = vld [vmem:[#allocation5 + $0x180] sm:$0xff]
    %v91 = vld [vmem:[#allocation5 + $0x188] sm:$0xff]
    %v92 = vld [vmem:[#allocation5 + $0x190] sm:$0xff]
    %v93 = vld [vmem:[#allocation5 + $0x198] sm:$0xff]
    %v94 = vld [vmem:[#allocation5 + $0x1a0] sm:$0xff]
    %v95 = vld [vmem:[#allocation5 + $0x1a8] sm:$0xff]
    %v96 = vld [vmem:[#allocation5 + $0x1b0] sm:$0xff]
    %v97 = vld [vmem:[#allocation5 + $0x1b8] sm:$0xff]
    %v98 = vld [vmem:[#allocation5 + $0x1c0] sm:$0xff]
    %v99 = vld [vmem:[#allocation5 + $0x1c8] sm:$0xff]
    %v100 = vld [vmem:[#allocation5 + $0x1d0] sm:$0xff]
    %v101 = vld [vmem:[#allocation5 + $0x1d8] sm:$0xff]
    %v102 = vld [vmem:[#allocation5 + $0x1e0] sm:$0xff]
    %v103 = vld [vmem:[#allocation5 + $0x1e8] sm:$0xff]
    %v104 = vmul.f32 %v40, %v40
    %v105 = vmul.f32 %v41, %v41
    %vm106 = vcmask 261120
    %v107 = vsel %vm106, %v104, 0.0
    %108 = vadd.xlane.f32.xlu0 %v107
    %v109 = vpop.xlane.xlu0 %108
    %v110 = vsel %vm106, %v105, 0.0
    %111 = vadd.xlane.f32.xlu0 %v110
    %v112 = vpop.xlane.xlu0 %111
    %v113 = vrcp.pop 32.0
    %v114 = vmul.f32 %v109, %v113
    %v115 = vmul.f32 %v112, %v113
    %v116 = vadd.f32 %v114, 1e-06
    %v117 = vadd.f32 %v115, 1e-06
    %v118 = vrsqrt.pop %v116
    %v119 = vrsqrt.pop %v117
    %v120 = vmul.f32 %v40, %v118
    %v121 = vmul.f32 %v41, %v119
    %v123 = vsel %vm106, %v42, 0
    %v126 = vsel %vm106, %v43, 0
    %v129 = vsel %vm106, %v44, 0
    %v132 = vsel %vm106, %v45, 0
    %v135 = vsel %vm106, %v46, 0
    %v138 = vsel %vm106, %v47, 0
    %v141 = vsel %vm106, %v48, 0
    %v144 = vsel %vm106, %v49, 0
    %v147 = vsel %vm106, %v50, 0
    %v150 = vsel %vm106, %v51, 0
    %v153 = vsel %vm106, %v52, 0
    %v156 = vsel %vm106, %v53, 0
    %v159 = vsel %vm106, %v54, 0
    %v162 = vsel %vm106, %v55, 0
    %v165 = vsel %vm106, %v56, 0
    %v168 = vsel %vm106, %v57, 0
    %v171 = vsel %vm106, %v58, 0
    %v174 = vsel %vm106, %v59, 0
    %v177 = vsel %vm106, %v60, 0
    %v180 = vsel %vm106, %v61, 0
    %v183 = vsel %vm106, %v62, 0
    %v186 = vsel %vm106, %v63, 0
    %v189 = vsel %vm106, %v64, 0
    %v192 = vsel %vm106, %v65, 0
    %v195 = vsel %vm106, %v120, 0
    %v198 = vsel %vm106, %v121, 0
    %200 = vmatprep.subr.mxu0 0.0
    %201 = vmatpush1.xpose.msra.mxu0 %v195
    %202 = vmatprep.subr.mxu0 0.0
    %203 = vmatpush1.xpose.msra.mxu0 %v198
    %204 = vmatprep.subr.mxu0 0.0
    %205 = vmatpush1.xpose.msra.mxu0 0.0
    %206 = vmatprep.subr.mxu0 0.0
    %207 = vmatpush1.xpose.msra.mxu0 0.0
    %208 = vmatprep.subr.mxu0 0.0
    %209 = vmatpush1.xpose.msra.mxu0 0.0
    %210 = vmatprep.subr.mxu0 0.0
    %211 = vmatpush1.xpose.msra.mxu0 0.0
    %212 = vmatprep.subr.mxu0 0.0
    %213 = vmatpush1.xpose.msra.mxu0 0.0
    %214 = vmatprep.subr.mxu0 0.0
    %215 = vmatpush1.xpose.msra.mxu0 0.0
    %216 = vmatprep.subr.mxu0 0.0
    %217 = vmatpush1.xpose.msra.mxu0 0.0
    %218 = vmatprep.subr.mxu0 0.0
    %219 = vmatpush1.xpose.msra.mxu0 0.0
    %220 = vmatprep.subr.mxu0 0.0
    %221 = vmatpush1.xpose.msra.mxu0 0.0
    %222 = vmatprep.subr.mxu0 0.0
    %223 = vmatpush1.xpose.msra.mxu0 0.0
    %224 = vmatprep.subr.mxu0 0.0
    %225 = vmatpush1.xpose.msra.mxu0 0.0
    %226 = vmatprep.subr.mxu0 0.0
    %227 = vmatpush1.xpose.msra.mxu0 0.0
    %228 = vmatprep.subr.mxu0 0.0
    %229 = vmatpush1.xpose.msra.mxu0 0.0
    %230 = vmatprep.subr.mxu0 0.0
    %231 = vmatpush1.xpose.msra.mxu0 0.0
    %232 = vmatprep.subr.mxu0 0.0
    %233 = vmatpush1.xpose.msra.mxu0 0.0
    %234 = vmatprep.subr.mxu0 0.0
    %235 = vmatpush1.xpose.msra.mxu0 0.0
    %236 = vmatprep.subr.mxu0 0.0
    %237 = vmatpush1.xpose.msra.mxu0 0.0
    %238 = vmatprep.subr.mxu0 0.0
    %239 = vmatpush1.xpose.msra.mxu0 0.0
    %240 = vmatprep.subr.mxu0 0.0
    %241 = vmatpush1.xpose.msra.mxu0 0.0
    %242 = vmatprep.subr.mxu0 0.0
    %243 = vmatpush1.xpose.msra.mxu0 0.0
    %244 = vmatprep.subr.mxu0 0.0
    %245 = vmatpush1.xpose.msra.mxu0 0.0
    %246 = vmatprep.subr.mxu0 0.0
    %247 = vmatpush1.xpose.msra.mxu0 0.0
    %248 = vmatprep.subr.mxu0 0.0
    %249 = vmatpush1.xpose.msra.mxu0 0.0
    %250 = vmatprep.subr.mxu0 0.0
    %251 = vmatpush1.xpose.msra.mxu0 0.0
    %252 = vmatprep.subr.mxu0 0.0
    %253 = vmatpush1.xpose.msra.mxu0 0.0
    %254 = vmatprep.subr.mxu0 0.0
    %255 = vmatpush1.xpose.msra.mxu0 0.0
    %256 = vmatprep.subr.mxu0 0.0
    %257 = vmatpush1.xpose.msra.mxu0 0.0
    %258 = vmatprep.subr.mxu0 0.0
    %259 = vmatpush1.xpose.msra.mxu0 0.0
    %260 = vmatprep.subr.mxu0 0.0
    %261 = vmatpush1.xpose.msra.mxu0 0.0
    %262 = vmatprep.subr.mxu0 0.0
    %263 = vmatpush1.xpose.msra.mxu0 0.0
    %264 = vmatprep.mubr.f32.mxu0 0.0
    %265 = vmatmul.mubr.f32.gmra.mrb[0].mxu0 %v123
    %v266 = vpop.f32.mrb[0].mxu0
    %v267 = vadd.f32 %v66, %v266
    %v268 = vpop.f32.mrb[0].mxu0
    %269 = vmatprep.mubr.f32.mxu0 0.0
    %270 = vmatmul.mubr.f32.gmra.mrb[0].mxu0 %v126
    %v271 = vpop.f32.mrb[0].mxu0
    %v272 = vadd.f32 %v67, %v271
    %v273 = vpop.f32.mrb[0].mxu0
    %274 = vmatprep.mubr.f32.mxu0 0.0
    %275 = vmatmul.mubr.f32.gmra.mrb[0].mxu0 %v129
    %v276 = vpop.f32.mrb[0].mxu0
    %v277 = vadd.f32 %v68, %v276
    %v278 = vpop.f32.mrb[0].mxu0
    %279 = vmatprep.mubr.f32.mxu0 0.0
    %280 = vmatmul.mubr.f32.gmra.mrb[0].mxu0 %v132
    %v281 = vpop.f32.mrb[0].mxu0
    %v282 = vadd.f32 %v69, %v281
    %v283 = vpop.f32.mrb[0].mxu0
    %284 = vmatprep.mubr.f32.mxu0 0.0
    %285 = vmatmul.mubr.f32.gmra.mrb[0].mxu0 %v135
    %v286 = vpop.f32.mrb[0].mxu0
    %v287 = vadd.f32 %v70, %v286
    %v288 = vpop.f32.mrb[0].mxu0
    %289 = vmatprep.mubr.f32.mxu0 0.0
    %290 = vmatmul.mubr.f32.gmra.mrb[0].mxu0 %v138
    %v291 = vpop.f32.mrb[0].mxu0
    %v292 = vadd.f32 %v71, %v291
    %v293 = vpop.f32.mrb[0].mxu0
    %294 = vmatprep.mubr.f32.mxu0 0.0
    %295 = vmatmul.mubr.f32.gmra.mrb[0].mxu0 %v141
    %v296 = vpop.f32.mrb[0].mxu0
    %v297 = vadd.f32 %v72, %v296
    %v298 = vpop.f32.mrb[0].mxu0
    %299 = vmatprep.mubr.f32.mxu0 0.0
    %300 = vmatmul.mubr.f32.gmra.mrb[0].mxu0 %v144
    %v301 = vpop.f32.mrb[0].mxu0
    %v302 = vadd.f32 %v73, %v301
    %v303 = vpop.f32.mrb[0].mxu0
    %304 = vmatprep.mubr.f32.mxu0 0.0
    %305 = vmatmul.mubr.f32.gmra.mrb[0].mxu0 %v147
    %v306 = vpop.f32.mrb[0].mxu0
    %v307 = vadd.f32 %v74, %v306
    %v308 = vpop.f32.mrb[0].mxu0
    %309 = vmatprep.mubr.f32.mxu0 0.0
    %310 = vmatmul.mubr.f32.gmra.mrb[0].mxu0 %v150
    %v311 = vpop.f32.mrb[0].mxu0
    %v312 = vadd.f32 %v75, %v311
    %v313 = vpop.f32.mrb[0].mxu0
    %314 = vmatprep.mubr.f32.mxu0 0.0
    %315 = vmatmul.mubr.f32.gmra.mrb[0].mxu0 %v153
    %v316 = vpop.f32.mrb[0].mxu0
    %v317 = vadd.f32 %v76, %v316
    %v318 = vpop.f32.mrb[0].mxu0
    %319 = vmatprep.mubr.f32.mxu0 0.0
    %320 = vmatmul.mubr.f32.gmra.mrb[0].mxu0 %v156
    %v321 = vpop.f32.mrb[0].mxu0
    %v322 = vadd.f32 %v77, %v321
    %v323 = vpop.f32.mrb[0].mxu0
    %324 = vmatprep.mubr.f32.mxu0 0.0
    %325 = vmatmul.mubr.f32.gmra.mrb[0].mxu0 %v159
    %v326 = vpop.f32.mrb[0].mxu0
    %v327 = vadd.f32 %v78, %v326
    %v328 = vpop.f32.mrb[0].mxu0
    %329 = vmatprep.mubr.f32.mxu0 0.0
    %330 = vmatmul.mubr.f32.gmra.mrb[0].mxu0 %v162
    %v331 = vpop.f32.mrb[0].mxu0
    %v332 = vadd.f32 %v79, %v331
    %v333 = vpop.f32.mrb[0].mxu0
    %334 = vmatprep.mubr.f32.mxu0 0.0
    %335 = vmatmul.mubr.f32.gmra.mrb[0].mxu0 %v165
    %v336 = vpop.f32.mrb[0].mxu0
    %v337 = vadd.f32 %v80, %v336
    %v338 = vpop.f32.mrb[0].mxu0
    %339 = vmatprep.mubr.f32.mxu0 0.0
    %340 = vmatmul.mubr.f32.gmra.mrb[0].mxu0 %v168
    %v341 = vpop.f32.mrb[0].mxu0
    %v342 = vadd.f32 %v81, %v341
    %v343 = vpop.f32.mrb[0].mxu0
    %344 = vmatprep.mubr.f32.mxu0 0.0
    %345 = vmatmul.mubr.f32.gmra.mrb[0].mxu0 %v171
    %v346 = vpop.f32.mrb[0].mxu0
    %v347 = vadd.f32 %v82, %v346
    %v348 = vpop.f32.mrb[0].mxu0
    %349 = vmatprep.mubr.f32.mxu0 0.0
    %350 = vmatmul.mubr.f32.gmra.mrb[0].mxu0 %v174
    %v351 = vpop.f32.mrb[0].mxu0
    %v352 = vadd.f32 %v83, %v351
    %v353 = vpop.f32.mrb[0].mxu0
    %354 = vmatprep.mubr.f32.mxu0 0.0
    %355 = vmatmul.mubr.f32.gmra.mrb[0].mxu0 %v177
    %v356 = vpop.f32.mrb[0].mxu0
    %v357 = vadd.f32 %v84, %v356
    %v358 = vpop.f32.mrb[0].mxu0
    %359 = vmatprep.mubr.f32.mxu0 0.0
    %360 = vmatmul.mubr.f32.gmra.mrb[0].mxu0 %v180
    %v361 = vpop.f32.mrb[0].mxu0
    %v362 = vadd.f32 %v85, %v361
    %v363 = vpop.f32.mrb[0].mxu0
    %364 = vmatprep.mubr.f32.mxu0 0.0
    %365 = vmatmul.mubr.f32.gmra.mrb[0].mxu0 %v183
    %v366 = vpop.f32.mrb[0].mxu0
    %v367 = vadd.f32 %v86, %v366
    %v368 = vpop.f32.mrb[0].mxu0
    %369 = vmatprep.mubr.f32.mxu0 0.0
    %370 = vmatmul.mubr.f32.gmra.mrb[0].mxu0 %v186
    %v371 = vpop.f32.mrb[0].mxu0
    %v372 = vadd.f32 %v87, %v371
    %v373 = vpop.f32.mrb[0].mxu0
    %374 = vmatprep.mubr.f32.mxu0 0.0
    %375 = vmatmul.mubr.f32.gmra.mrb[0].mxu0 %v189
    %v376 = vpop.f32.mrb[0].mxu0
    %v377 = vadd.f32 %v88, %v376
    %v378 = vpop.f32.mrb[0].mxu0
    %379 = vmatprep.mubr.f32.mxu0 0.0
    %380 = vmatmul.mubr.f32.gmra.mrb[0].mxu0 %v192
    %v381 = vpop.f32.mrb[0].mxu0
    %v382 = vadd.f32 %v89, %v381
    %v383 = vpop.f32.mrb[0].mxu0
    %384 = vdwg.mxu0
    %385 = vxpose.xlu0.b32.start [1/16] %v267, 128
    %386 = vxpose.xlu0.b32.cont [2/16] 0.0, 128
    %387 = vxpose.xlu0.b32.cont [3/16] 0.0, 128
    %388 = vxpose.xlu0.b32.cont [4/16] 0.0, 128
    %389 = vxpose.xlu0.b32.cont [5/16] 0.0, 128
    %390 = vxpose.xlu0.b32.cont [6/16] 0.0, 128
    %391 = vxpose.xlu0.b32.cont [7/16] 0.0, 128
    %392 = vxpose.xlu0.b32.cont [8/16] 0.0, 128
    %393 = vxpose.xlu0.b32.cont [9/16] 0.0, 128
    %394 = vxpose.xlu0.b32.cont [10/16] 0.0, 128
    %395 = vxpose.xlu0.b32.cont [11/16] 0.0, 128
    %396 = vxpose.xlu0.b32.cont [12/16] 0.0, 128
    %397 = vxpose.xlu0.b32.cont [13/16] 0.0, 128
    %398 = vxpose.xlu0.b32.cont [14/16] 0.0, 128
    %399 = vxpose.xlu0.b32.cont [15/16] 0.0, 128
    %400 = vxpose.xlu0.b32.end [16/16] 0.0, 128
    %v401 = vpop.trf.xlu0
    %v402 = vpop.trf.xlu0
    %v403 = vpop.trf.xlu0
    %v404 = vpop.trf.xlu0
    %v405 = vpop.trf.xlu0
    %v406 = vpop.trf.xlu0
    %v407 = vpop.trf.xlu0
    %v408 = vpop.trf.xlu0
    %v409 = vpop.trf.xlu0
    %v410 = vpop.trf.xlu0
    %v411 = vpop.trf.xlu0
    %v412 = vpop.trf.xlu0
    %v413 = vpop.trf.xlu0
    %v414 = vpop.trf.xlu0
    %v415 = vpop.trf.xlu0
    %v416 = vpop.trf.xlu0
    %417 = vxpose.xlu0.b32.start [1/16] %v272, 128
    %418 = vxpose.xlu0.b32.cont [2/16] 0.0, 128
    %419 = vxpose.xlu0.b32.cont [3/16] 0.0, 128
    %420 = vxpose.xlu0.b32.cont [4/16] 0.0, 128
    %421 = vxpose.xlu0.b32.cont [5/16] 0.0, 128
    %422 = vxpose.xlu0.b32.cont [6/16] 0.0, 128
    %423 = vxpose.xlu0.b32.cont [7/16] 0.0, 128
    %424 = vxpose.xlu0.b32.cont [8/16] 0.0, 128
    %425 = vxpose.xlu0.b32.cont [9/16] 0.0, 128
    %426 = vxpose.xlu0.b32.cont [10/16] 0.0, 128
    %427 = vxpose.xlu0.b32.cont [11/16] 0.0, 128
    %428 = vxpose.xlu0.b32.cont [12/16] 0.0, 128
    %429 = vxpose.xlu0.b32.cont [13/16] 0.0, 128
    %430 = vxpose.xlu0.b32.cont [14/16] 0.0, 128
    %431 = vxpose.xlu0.b32.cont [15/16] 0.0, 128
    %432 = vxpose.xlu0.b32.end [16/16] 0.0, 128
    %v433 = vpop.trf.xlu0
    %v434 = vpop.trf.xlu0
    %v435 = vpop.trf.xlu0
    %v436 = vpop.trf.xlu0
    %v437 = vpop.trf.xlu0
    %v438 = vpop.trf.xlu0
    %v439 = vpop.trf.xlu0
    %v440 = vpop.trf.xlu0
    %v441 = vpop.trf.xlu0
    %v442 = vpop.trf.xlu0
    %v443 = vpop.trf.xlu0
    %v444 = vpop.trf.xlu0
    %v445 = vpop.trf.xlu0
    %v446 = vpop.trf.xlu0
    %v447 = vpop.trf.xlu0
    %v448 = vpop.trf.xlu0
    %449 = vxpose.xlu0.b32.start [1/16] %v277, 128
    %450 = vxpose.xlu0.b32.cont [2/16] 0.0, 128
    %451 = vxpose.xlu0.b32.cont [3/16] 0.0, 128
    %452 = vxpose.xlu0.b32.cont [4/16] 0.0, 128
    %453 = vxpose.xlu0.b32.cont [5/16] 0.0, 128
    %454 = vxpose.xlu0.b32.cont [6/16] 0.0, 128
    %455 = vxpose.xlu0.b32.cont [7/16] 0.0, 128
    %456 = vxpose.xlu0.b32.cont [8/16] 0.0, 128
    %457 = vxpose.xlu0.b32.cont [9/16] 0.0, 128
    %458 = vxpose.xlu0.b32.cont [10/16] 0.0, 128
    %459 = vxpose.xlu0.b32.cont [11/16] 0.0, 128
    %460 = vxpose.xlu0.b32.cont [12/16] 0.0, 128
    %461 = vxpose.xlu0.b32.cont [13/16] 0.0, 128
    %462 = vxpose.xlu0.b32.cont [14/16] 0.0, 128
    %463 = vxpose.xlu0.b32.cont [15/16] 0.0, 128
    %464 = vxpose.xlu0.b32.end [16/16] 0.0, 128
    %v465 = vpop.trf.xlu0
    %v466 = vpop.trf.xlu0
    %v467 = vpop.trf.xlu0
    %v468 = vpop.trf.xlu0
    %v469 = vpop.trf.xlu0
    %v470 = vpop.trf.xlu0
    %v471 = vpop.trf.xlu0
    %v472 = vpop.trf.xlu0
    %v473 = vpop.trf.xlu0
    %v474 = vpop.trf.xlu0
    %v475 = vpop.trf.xlu0
    %v476 = vpop.trf.xlu0
    %v477 = vpop.trf.xlu0
    %v478 = vpop.trf.xlu0
    %v479 = vpop.trf.xlu0
    %v480 = vpop.trf.xlu0
    %481 = vxpose.xlu0.b32.start [1/16] %v282, 128
    %482 = vxpose.xlu0.b32.cont [2/16] 0.0, 128
    %483 = vxpose.xlu0.b32.cont [3/16] 0.0, 128
    %484 = vxpose.xlu0.b32.cont [4/16] 0.0, 128
    %485 = vxpose.xlu0.b32.cont [5/16] 0.0, 128
    %486 = vxpose.xlu0.b32.cont [6/16] 0.0, 128
    %487 = vxpose.xlu0.b32.cont [7/16] 0.0, 128
    %488 = vxpose.xlu0.b32.cont [8/16] 0.0, 128
    %489 = vxpose.xlu0.b32.cont [9/16] 0.0, 128
    %490 = vxpose.xlu0.b32.cont [10/16] 0.0, 128
    %491 = vxpose.xlu0.b32.cont [11/16] 0.0, 128
    %492 = vxpose.xlu0.b32.cont [12/16] 0.0, 128
    %493 = vxpose.xlu0.b32.cont [13/16] 0.0, 128
    %494 = vxpose.xlu0.b32.cont [14/16] 0.0, 128
    %495 = vxpose.xlu0.b32.cont [15/16] 0.0, 128
    %496 = vxpose.xlu0.b32.end [16/16] 0.0, 128
    %v497 = vpop.trf.xlu0
    %v498 = vpop.trf.xlu0
    %v499 = vpop.trf.xlu0
    %v500 = vpop.trf.xlu0
    %v501 = vpop.trf.xlu0
    %v502 = vpop.trf.xlu0
    %v503 = vpop.trf.xlu0
    %v504 = vpop.trf.xlu0
    %v505 = vpop.trf.xlu0
    %v506 = vpop.trf.xlu0
    %v507 = vpop.trf.xlu0
    %v508 = vpop.trf.xlu0
    %v509 = vpop.trf.xlu0
    %v510 = vpop.trf.xlu0
    %v511 = vpop.trf.xlu0
    %v512 = vpop.trf.xlu0
    %vm513 = vcmask 64512
    %v515 = vsel %vm513, %v401, 0
    %v518 = vsel %vm513, %v402, 0
    %520 = vmatprep.subr.mxu0 0.0
    %521 = vmatpush1.msra.mxu0 %v287
    %522 = vmatprep.subr.mxu0 0.0
    %523 = vmatpush1.msra.mxu0 0.0
    %524 = vmatprep.subr.mxu0 0.0
    %525 = vmatpush1.msra.mxu0 0.0
    %526 = vmatprep.subr.mxu0 0.0
    %527 = vmatpush1.msra.mxu0 0.0
    %528 = vmatprep.subr.mxu0 0.0
    %529 = vmatpush1.msra.mxu0 0.0
    %530 = vmatprep.subr.mxu0 0.0
    %531 = vmatpush1.msra.mxu0 0.0
    %532 = vmatprep.subr.mxu0 0.0
    %533 = vmatpush1.msra.mxu0 0.0
    %534 = vmatprep.subr.mxu0 0.0
    %535 = vmatpush1.msra.mxu0 0.0
    %536 = vmatprep.subr.mxu0 0.0
    %537 = vmatpush1.msra.mxu0 0.0
    %538 = vmatprep.subr.mxu0 0.0
    %539 = vmatpush1.msra.mxu0 0.0
    %540 = vmatprep.subr.mxu0 0.0
    %541 = vmatpush1.msra.mxu0 0.0
    %542 = vmatprep.subr.mxu0 0.0
    %543 = vmatpush1.msra.mxu0 0.0
    %544 = vmatprep.subr.mxu0 0.0
    %545 = vmatpush1.msra.mxu0 0.0
    %546 = vmatprep.subr.mxu0 0.0
    %547 = vmatpush1.msra.mxu0 0.0
    %548 = vmatprep.subr.mxu0 0.0
    %549 = vmatpush1.msra.mxu0 0.0
    %550 = vmatprep.subr.mxu0 0.0
    %551 = vmatpush1.msra.mxu0 0.0
    %552 = vmatprep.subr.mxu0 0.0
    %553 = vmatpush1.msra.mxu0 0.0
    %554 = vmatprep.subr.mxu0 0.0
    %555 = vmatpush1.msra.mxu0 0.0
    %556 = vmatprep.subr.mxu0 0.0
    %557 = vmatpush1.msra.mxu0 0.0
    %558 = vmatprep.subr.mxu0 0.0
    %559 = vmatpush1.msra.mxu0 0.0
    %560 = vmatprep.subr.mxu0 0.0
    %561 = vmatpush1.msra.mxu0 0.0
    %562 = vmatprep.subr.mxu0 0.0
    %563 = vmatpush1.msra.mxu0 0.0
    %564 = vmatprep.subr.mxu0 0.0
    %565 = vmatpush1.msra.mxu0 0.0
    %566 = vmatprep.subr.mxu0 0.0
    %567 = vmatpush1.msra.mxu0 0.0
    %568 = vmatprep.subr.mxu0 0.0
    %569 = vmatpush1.msra.mxu0 0.0
    %570 = vmatprep.subr.mxu0 0.0
    %571 = vmatpush1.msra.mxu0 0.0
    %572 = vmatprep.subr.mxu0 0.0
    %573 = vmatpush1.msra.mxu0 0.0
    %574 = vmatprep.subr.mxu0 0.0
    %575 = vmatpush1.msra.mxu0 0.0
    %576 = vmatprep.subr.mxu0 0.0
    %577 = vmatpush1.msra.mxu0 0.0
    %578 = vmatprep.subr.mxu0 0.0
    %579 = vmatpush1.msra.mxu0 0.0
    %580 = vmatprep.subr.mxu0 0.0
    %581 = vmatpush1.msra.mxu0 0.0
    %582 = vmatprep.subr.mxu0 0.0
    %583 = vmatpush1.msra.mxu0 0.0
    %584 = vmatprep.mubr.f32.mxu0 0.0
    %585 = vmatmul.mubr.f32.gmra.mrb[0].mxu0 %v515
    %v586 = vpop.f32.mrb[0].mxu0
    %v587 = vadd.f32 %v102, %v586
    %v588 = vpop.f32.mrb[0].mxu0
    %589 = vmatprep.mubr.f32.mxu0 0.0
    %590 = vmatmul.mubr.f32.gmra.mrb[0].mxu0 %v518
    %v591 = vpop.f32.mrb[0].mxu0
    %v592 = vadd.f32 %v103, %v591
    %v593 = vpop.f32.mrb[0].mxu0
    %594 = vdwg.mxu0
    %v596 = vsel %vm513, %v433, 0
    %v599 = vsel %vm513, %v434, 0
    %601 = vmatprep.subr.mxu0 0.0
    %602 = vmatpush1.msra.mxu0 %v292
    %603 = vmatprep.subr.mxu0 0.0
    %604 = vmatpush1.msra.mxu0 0.0
    %605 = vmatprep.subr.mxu0 0.0
    %606 = vmatpush1.msra.mxu0 0.0
    %607 = vmatprep.subr.mxu0 0.0
    %608 = vmatpush1.msra.mxu0 0.0
    %609 = vmatprep.subr.mxu0 0.0
    %610 = vmatpush1.msra.mxu0 0.0
    %611 = vmatprep.subr.mxu0 0.0
    %612 = vmatpush1.msra.mxu0 0.0
    %613 = vmatprep.subr.mxu0 0.0
    %614 = vmatpush1.msra.mxu0 0.0
    %615 = vmatprep.subr.mxu0 0.0
    %616 = vmatpush1.msra.mxu0 0.0
    %617 = vmatprep.subr.mxu0 0.0
    %618 = vmatpush1.msra.mxu0 0.0
    %619 = vmatprep.subr.mxu0 0.0
    %620 = vmatpush1.msra.mxu0 0.0
    %621 = vmatprep.subr.mxu0 0.0
    %622 = vmatpush1.msra.mxu0 0.0
    %623 = vmatprep.subr.mxu0 0.0
    %624 = vmatpush1.msra.mxu0 0.0
    %625 = vmatprep.subr.mxu0 0.0
    %626 = vmatpush1.msra.mxu0 0.0
    %627 = vmatprep.subr.mxu0 0.0
    %628 = vmatpush1.msra.mxu0 0.0
    %629 = vmatprep.subr.mxu0 0.0
    %630 = vmatpush1.msra.mxu0 0.0
    %631 = vmatprep.subr.mxu0 0.0
    %632 = vmatpush1.msra.mxu0 0.0
    %633 = vmatprep.subr.mxu0 0.0
    %634 = vmatpush1.msra.mxu0 0.0
    %635 = vmatprep.subr.mxu0 0.0
    %636 = vmatpush1.msra.mxu0 0.0
    %637 = vmatprep.subr.mxu0 0.0
    %638 = vmatpush1.msra.mxu0 0.0
    %639 = vmatprep.subr.mxu0 0.0
    %640 = vmatpush1.msra.mxu0 0.0
    %641 = vmatprep.subr.mxu0 0.0
    %642 = vmatpush1.msra.mxu0 0.0
    %643 = vmatprep.subr.mxu0 0.0
    %644 = vmatpush1.msra.mxu0 0.0
    %645 = vmatprep.subr.mxu0 0.0
    %646 = vmatpush1.msra.mxu0 0.0
    %647 = vmatprep.subr.mxu0 0.0
    %648 = vmatpush1.msra.mxu0 0.0
    %649 = vmatprep.subr.mxu0 0.0
    %650 = vmatpush1.msra.mxu0 0.0
    %651 = vmatprep.subr.mxu0 0.0
    %652 = vmatpush1.msra.mxu0 0.0
    %653 = vmatprep.subr.mxu0 0.0
    %654 = vmatpush1.msra.mxu0 0.0
    %655 = vmatprep.subr.mxu0 0.0
    %656 = vmatpush1.msra.mxu0 0.0
    %657 = vmatprep.subr.mxu0 0.0
    %658 = vmatpush1.msra.mxu0 0.0
    %659 = vmatprep.subr.mxu0 0.0
    %660 = vmatpush1.msra.mxu0 0.0
    %661 = vmatprep.subr.mxu0 0.0
    %662 = vmatpush1.msra.mxu0 0.0
    %663 = vmatprep.subr.mxu0 0.0
    %664 = vmatpush1.msra.mxu0 0.0
    %665 = vmatprep.mubr.f32.mxu0 0.0
    %666 = vmatmul.mubr.f32.gmra.mrb[0].mxu0 %v596
    %v667 = vpop.f32.mrb[0].mxu0
    %v668 = vadd.f32 %v102, %v667
    %v669 = vpop.f32.mrb[0].mxu0
    %670 = vmatprep.mubr.f32.mxu0 0.0
    %671 = vmatmul.mubr.f32.gmra.mrb[0].mxu0 %v599
    %v672 = vpop.f32.mrb[0].mxu0
    %v673 = vadd.f32 %v103, %v672
    %v674 = vpop.f32.mrb[0].mxu0
    %675 = vdwg.mxu0
    %v677 = vsel %vm513, %v465, 0
    %v680 = vsel %vm513, %v466, 0
    %682 = vmatprep.subr.mxu0 0.0
    %683 = vmatpush1.msra.mxu0 %v297
    %684 = vmatprep.subr.mxu0 0.0
    %685 = vmatpush1.msra.mxu0 0.0
    %686 = vmatprep.subr.mxu0 0.0
    %687 = vmatpush1.msra.mxu0 0.0
    %688 = vmatprep.subr.mxu0 0.0
    %689 = vmatpush1.msra.mxu0 0.0
    %690 = vmatprep.subr.mxu0 0.0
    %691 = vmatpush1.msra.mxu0 0.0
    %692 = vmatprep.subr.mxu0 0.0
    %693 = vmatpush1.msra.mxu0 0.0
    %694 = vmatprep.subr.mxu0 0.0
    %695 = vmatpush1.msra.mxu0 0.0
    %696 = vmatprep.subr.mxu0 0.0
    %697 = vmatpush1.msra.mxu0 0.0
    %698 = vmatprep.subr.mxu0 0.0
    %699 = vmatpush1.msra.mxu0 0.0
    %700 = vmatprep.subr.mxu0 0.0
    %701 = vmatpush1.msra.mxu0 0.0
    %702 = vmatprep.subr.mxu0 0.0
    %703 = vmatpush1.msra.mxu0 0.0
    %704 = vmatprep.subr.mxu0 0.0
    %705 = vmatpush1.msra.mxu0 0.0
    %706 = vmatprep.subr.mxu0 0.0
    %707 = vmatpush1.msra.mxu0 0.0
    %708 = vmatprep.subr.mxu0 0.0
    %709 = vmatpush1.msra.mxu0 0.0
    %710 = vmatprep.subr.mxu0 0.0
    %711 = vmatpush1.msra.mxu0 0.0
    %712 = vmatprep.subr.mxu0 0.0
    %713 = vmatpush1.msra.mxu0 0.0
    %714 = vmatprep.subr.mxu0 0.0
    %715 = vmatpush1.msra.mxu0 0.0
    %716 = vmatprep.subr.mxu0 0.0
    %717 = vmatpush1.msra.mxu0 0.0
    %718 = vmatprep.subr.mxu0 0.0
    %719 = vmatpush1.msra.mxu0 0.0
    %720 = vmatprep.subr.mxu0 0.0
    %721 = vmatpush1.msra.mxu0 0.0
    %722 = vmatprep.subr.mxu0 0.0
    %723 = vmatpush1.msra.mxu0 0.0
    %724 = vmatprep.subr.mxu0 0.0
    %725 = vmatpush1.msra.mxu0 0.0
    %726 = vmatprep.subr.mxu0 0.0
    %727 = vmatpush1.msra.mxu0 0.0
    %728 = vmatprep.subr.mxu0 0.0
    %729 = vmatpush1.msra.mxu0 0.0
    %730 = vmatprep.subr.mxu0 0.0
    %731 = vmatpush1.msra.mxu0 0.0
    %732 = vmatprep.subr.mxu0 0.0
    %733 = vmatpush1.msra.mxu0 0.0
    %734 = vmatprep.subr.mxu0 0.0
    %735 = vmatpush1.msra.mxu0 0.0
    %736 = vmatprep.subr.mxu0 0.0
    %737 = vmatpush1.msra.mxu0 0.0
    %738 = vmatprep.subr.mxu0 0.0
    %739 = vmatpush1.msra.mxu0 0.0
    %740 = vmatprep.subr.mxu0 0.0
    %741 = vmatpush1.msra.mxu0 0.0
    %742 = vmatprep.subr.mxu0 0.0
    %743 = vmatpush1.msra.mxu0 0.0
    %744 = vmatprep.subr.mxu0 0.0
    %745 = vmatpush1.msra.mxu0 0.0
    %746 = vmatprep.mubr.f32.mxu0 0.0
    %747 = vmatmul.mubr.f32.gmra.mrb[0].mxu0 %v677
    %v748 = vpop.f32.mrb[0].mxu0
    %v749 = vadd.f32 %v102, %v748
    %v750 = vpop.f32.mrb[0].mxu0
    %751 = vmatprep.mubr.f32.mxu0 0.0
    %752 = vmatmul.mubr.f32.gmra.mrb[0].mxu0 %v680
    %v753 = vpop.f32.mrb[0].mxu0
    %v754 = vadd.f32 %v103, %v753
    %v755 = vpop.f32.mrb[0].mxu0
    %756 = vdwg.mxu0
    %v758 = vsel %vm513, %v497, 0
    %v761 = vsel %vm513, %v498, 0
    %763 = vmatprep.subr.mxu0 0.0
    %764 = vmatpush1.msra.mxu0 %v302
    %765 = vmatprep.subr.mxu0 0.0
    %766 = vmatpush1.msra.mxu0 0.0
    %767 = vmatprep.subr.mxu0 0.0
    %768 = vmatpush1.msra.mxu0 0.0
    %769 = vmatprep.subr.mxu0 0.0
    %770 = vmatpush1.msra.mxu0 0.0
    %771 = vmatprep.subr.mxu0 0.0
    %772 = vmatpush1.msra.mxu0 0.0
    %773 = vmatprep.subr.mxu0 0.0
    %774 = vmatpush1.msra.mxu0 0.0
    %775 = vmatprep.subr.mxu0 0.0
    %776 = vmatpush1.msra.mxu0 0.0
    %777 = vmatprep.subr.mxu0 0.0
    %778 = vmatpush1.msra.mxu0 0.0
    %779 = vmatprep.subr.mxu0 0.0
    %780 = vmatpush1.msra.mxu0 0.0
    %781 = vmatprep.subr.mxu0 0.0
    %782 = vmatpush1.msra.mxu0 0.0
    %783 = vmatprep.subr.mxu0 0.0
    %784 = vmatpush1.msra.mxu0 0.0
    %785 = vmatprep.subr.mxu0 0.0
    %786 = vmatpush1.msra.mxu0 0.0
    %787 = vmatprep.subr.mxu0 0.0
    %788 = vmatpush1.msra.mxu0 0.0
    %789 = vmatprep.subr.mxu0 0.0
    %790 = vmatpush1.msra.mxu0 0.0
    %791 = vmatprep.subr.mxu0 0.0
    %792 = vmatpush1.msra.mxu0 0.0
    %793 = vmatprep.subr.mxu0 0.0
    %794 = vmatpush1.msra.mxu0 0.0
    %795 = vmatprep.subr.mxu0 0.0
    %796 = vmatpush1.msra.mxu0 0.0
    %797 = vmatprep.subr.mxu0 0.0
    %798 = vmatpush1.msra.mxu0 0.0
    %799 = vmatprep.subr.mxu0 0.0
    %800 = vmatpush1.msra.mxu0 0.0
    %801 = vmatprep.subr.mxu0 0.0
    %802 = vmatpush1.msra.mxu0 0.0
    %803 = vmatprep.subr.mxu0 0.0
    %804 = vmatpush1.msra.mxu0 0.0
    %805 = vmatprep.subr.mxu0 0.0
    %806 = vmatpush1.msra.mxu0 0.0
    %807 = vmatprep.subr.mxu0 0.0
    %808 = vmatpush1.msra.mxu0 0.0
    %809 = vmatprep.subr.mxu0 0.0
    %810 = vmatpush1.msra.mxu0 0.0
    %811 = vmatprep.subr.mxu0 0.0
    %812 = vmatpush1.msra.mxu0 0.0
    %813 = vmatprep.subr.mxu0 0.0
    %814 = vmatpush1.msra.mxu0 0.0
    %815 = vmatprep.subr.mxu0 0.0
    %816 = vmatpush1.msra.mxu0 0.0
    %817 = vmatprep.subr.mxu0 0.0
    %818 = vmatpush1.msra.mxu0 0.0
    %819 = vmatprep.subr.mxu0 0.0
    %820 = vmatpush1.msra.mxu0 0.0
    %821 = vmatprep.subr.mxu0 0.0
    %822 = vmatpush1.msra.mxu0 0.0
    %823 = vmatprep.subr.mxu0 0.0
    %824 = vmatpush1.msra.mxu0 0.0
    %825 = vmatprep.subr.mxu0 0.0
    %826 = vmatpush1.msra.mxu0 0.0
    %827 = vmatprep.mubr.f32.mxu0 0.0
    %828 = vmatmul.mubr.f32.gmra.mrb[0].mxu0 %v758
    %v829 = vpop.f32.mrb[0].mxu0
    %v830 = vadd.f32 %v102, %v829
    %v831 = vpop.f32.mrb[0].mxu0
    %832 = vmatprep.mubr.f32.mxu0 0.0
    %833 = vmatmul.mubr.f32.gmra.mrb[0].mxu0 %v761
    %v834 = vpop.f32.mrb[0].mxu0
    %v835 = vadd.f32 %v103, %v834
    %v836 = vpop.f32.mrb[0].mxu0
    %837 = vdwg.mxu0
    %vm838 = vcmask 130048
    %v839 = vsel %vm838, %v587, -inf
    %840 = vmax.xlane.f32.xlu0 %v839
    %v841 = vpop.xlane.xlu0 %840
    %v842 = vsel %vm838, %v592, -inf
    %843 = vmax.xlane.f32.xlu0 %v842
    %v844 = vpop.xlane.xlu0 %843
    %v845 = vsel %vm838, %v668, -inf
    %846 = vmax.xlane.f32.xlu0 %v845
    %v847 = vpop.xlane.xlu0 %846
    %v848 = vsel %vm838, %v673, -inf
    %849 = vmax.xlane.f32.xlu0 %v848
    %v850 = vpop.xlane.xlu0 %849
    %v851 = vsel %vm838, %v749, -inf
    %852 = vmax.xlane.f32.xlu0 %v851
    %v853 = vpop.xlane.xlu0 %852
    %v854 = vsel %vm838, %v754, -inf
    %855 = vmax.xlane.f32.xlu0 %v854
    %v856 = vpop.xlane.xlu0 %855
    %v857 = vsel %vm838, %v830, -inf
    %858 = vmax.xlane.f32.xlu0 %v857
    %v859 = vpop.xlane.xlu0 %858
    %v860 = vsel %vm838, %v835, -inf
    %861 = vmax.xlane.f32.xlu0 %v860
    %v862 = vpop.xlane.xlu0 %861
    %v863 = vsub.f32 %v587, %v841
    %v864 = vsub.f32 %v592, %v844
    %v865 = vsub.f32 %v668, %v847
    %v866 = vsub.f32 %v673, %v850
    %v867 = vsub.f32 %v749, %v853
    %v868 = vsub.f32 %v754, %v856
    %v869 = vsub.f32 %v830, %v859
    %v870 = vsub.f32 %v835, %v862
    %v871 = vmul.f32 %v863, 1.442695
    %v872 = vpow.pop %v871
    %v873 = vmul.f32 %v864, 1.442695
    %v874 = vpow.pop %v873
    %v875 = vmul.f32 %v865, 1.442695
    %v876 = vpow.pop %v875
    %v877 = vmul.f32 %v866, 1.442695
    %v878 = vpow.pop %v877
    %v879 = vmul.f32 %v867, 1.442695
    %v880 = vpow.pop %v879
    %v881 = vmul.f32 %v868, 1.442695
    %v882 = vpow.pop %v881
    %v883 = vmul.f32 %v869, 1.442695
    %v884 = vpow.pop %v883
    %v885 = vmul.f32 %v870, 1.442695
    %v886 = vpow.pop %v885
    %v887 = vsel %vm838, %v872, 0.0
    %888 = vadd.xlane.f32.xlu0 %v887
    %v889 = vpop.xlane.xlu0 %888
    %v890 = vsel %vm838, %v874, 0.0
    %891 = vadd.xlane.f32.xlu0 %v890
    %v892 = vpop.xlane.xlu0 %891
    %v893 = vsel %vm838, %v876, 0.0
    %894 = vadd.xlane.f32.xlu0 %v893
    %v895 = vpop.xlane.xlu0 %894
    %v896 = vsel %vm838, %v878, 0.0
    %897 = vadd.xlane.f32.xlu0 %v896
    %v898 = vpop.xlane.xlu0 %897
    %v899 = vsel %vm838, %v880, 0.0
    %900 = vadd.xlane.f32.xlu0 %v899
    %v901 = vpop.xlane.xlu0 %900
    %v902 = vsel %vm838, %v882, 0.0
    %903 = vadd.xlane.f32.xlu0 %v902
    %v904 = vpop.xlane.xlu0 %903
    %v905 = vsel %vm838, %v884, 0.0
    %906 = vadd.xlane.f32.xlu0 %v905
    %v907 = vpop.xlane.xlu0 %906
    %v908 = vsel %vm838, %v886, 0.0
    %909 = vadd.xlane.f32.xlu0 %v908
    %v910 = vpop.xlane.xlu0 %909
    %v911 = vrcp.pop %v889
    %v912 = vrcp.pop %v892
    %v913 = vrcp.pop %v895
    %v914 = vrcp.pop %v898
    %v915 = vrcp.pop %v901
    %v916 = vrcp.pop %v904
    %v917 = vrcp.pop %v907
    %v918 = vrcp.pop %v910
    %v919 = vmul.f32 %v872, %v911
    %v920 = vmul.f32 %v874, %v912
    %v921 = vmul.f32 %v876, %v913
    %v922 = vmul.f32 %v878, %v914
    %v923 = vmul.f32 %v880, %v915
    %v924 = vmul.f32 %v882, %v916
    %v925 = vmul.f32 %v884, %v917
    %v926 = vmul.f32 %v886, %v918
    %v928 = vsel %vm838, %v919, 0
    %v931 = vsel %vm838, %v920, 0
    %v934 = vsel %vm838, %v307, 0
    %v937 = vsel %vm838, %v312, 0
    %v940 = vsel %vm838, %v317, 0
    %v943 = vsel %vm838, %v322, 0
    %945 = vmatprep.subr.mxu0 0.0
    %946 = vmatpush1.xpose.msra.mxu0 %v934
    %947 = vmatprep.subr.mxu0 0.0
    %948 = vmatpush1.xpose.msra.mxu0 %v937
    %949 = vmatprep.subr.mxu0 0.0
    %950 = vmatpush1.xpose.msra.mxu0 %v940
    %951 = vmatprep.subr.mxu0 0.0
    %952 = vmatpush1.xpose.msra.mxu0 %v943
    %953 = vmatprep.subr.mxu0 0.0
    %954 = vmatpush1.xpose.msra.mxu0 0.0
    %955 = vmatprep.subr.mxu0 0.0
    %956 = vmatpush1.xpose.msra.mxu0 0.0
    %957 = vmatprep.subr.mxu0 0.0
    %958 = vmatpush1.xpose.msra.mxu0 0.0
    %959 = vmatprep.subr.mxu0 0.0
    %960 = vmatpush1.xpose.msra.mxu0 0.0
    %961 = vmatprep.subr.mxu0 0.0
    %962 = vmatpush1.xpose.msra.mxu0 0.0
    %963 = vmatprep.subr.mxu0 0.0
    %964 = vmatpush1.xpose.msra.mxu0 0.0
    %965 = vmatprep.subr.mxu0 0.0
    %966 = vmatpush1.xpose.msra.mxu0 0.0
    %967 = vmatprep.subr.mxu0 0.0
    %968 = vmatpush1.xpose.msra.mxu0 0.0
    %969 = vmatprep.subr.mxu0 0.0
    %970 = vmatpush1.xpose.msra.mxu0 0.0
    %971 = vmatprep.subr.mxu0 0.0
    %972 = vmatpush1.xpose.msra.mxu0 0.0
    %973 = vmatprep.subr.mxu0 0.0
    %974 = vmatpush1.xpose.msra.mxu0 0.0
    %975 = vmatprep.subr.mxu0 0.0
    %976 = vmatpush1.xpose.msra.mxu0 0.0
    %977 = vmatprep.subr.mxu0 0.0
    %978 = vmatpush1.xpose.msra.mxu0 0.0
    %979 = vmatprep.subr.mxu0 0.0
    %980 = vmatpush1.xpose.msra.mxu0 0.0
    %981 = vmatprep.subr.mxu0 0.0
    %982 = vmatpush1.xpose.msra.mxu0 0.0
    %983 = vmatprep.subr.mxu0 0.0
    %984 = vmatpush1.xpose.msra.mxu0 0.0
    %985 = vmatprep.subr.mxu0 0.0
    %986 = vmatpush1.xpose.msra.mxu0 0.0
    %987 = vmatprep.subr.mxu0 0.0
    %988 = vmatpush1.xpose.msra.mxu0 0.0
    %989 = vmatprep.subr.mxu0 0.0
    %990 = vmatpush1.xpose.msra.mxu0 0.0
    %991 = vmatprep.subr.mxu0 0.0
    %992 = vmatpush1.xpose.msra.mxu0 0.0
    %993 = vmatprep.subr.mxu0 0.0
    %994 = vmatpush1.xpose.msra.mxu0 0.0
    %995 = vmatprep.subr.mxu0 0.0
    %996 = vmatpush1.xpose.msra.mxu0 0.0
    %997 = vmatprep.subr.mxu0 0.0
    %998 = vmatpush1.xpose.msra.mxu0 0.0
    %999 = vmatprep.subr.mxu0 0.0
    %1000 = vmatpush1.xpose.msra.mxu0 0.0
    %1001 = vmatprep.subr.mxu0 0.0
    %1002 = vmatpush1.xpose.msra.mxu0 0.0
    %1003 = vmatprep.subr.mxu0 0.0
    %1004 = vmatpush1.xpose.msra.mxu0 0.0
    %1005 = vmatprep.subr.mxu0 0.0
    %1006 = vmatpush1.xpose.msra.mxu0 0.0
    %1007 = vmatprep.subr.mxu0 0.0
    %1008 = vmatpush1.xpose.msra.mxu0 0.0
    %1009 = vmatprep.mubr.f32.mxu0 0.0
    %1010 = vmatmul.mubr.f32.gmra.mrb[0].mxu0 %v928
    %v1011 = vpop.f32.mrb[0].mxu0
    %v1012 = vadd.f32 0.0, %v1011
    %v1013 = vpop.f32.mrb[0].mxu0
    %1014 = vmatprep.mubr.f32.mxu0 0.0
    %1015 = vmatmul.mubr.f32.gmra.mrb[0].mxu0 %v931
    %v1016 = vpop.f32.mrb[0].mxu0
    %v1017 = vadd.f32 0.0, %v1016
    %v1018 = vpop.f32.mrb[0].mxu0
    %1019 = vdwg.mxu0
    %v1021 = vsel %vm838, %v921, 0
    %v1024 = vsel %vm838, %v922, 0
    %v1027 = vsel %vm838, %v327, 0
    %v1030 = vsel %vm838, %v332, 0
    %v1033 = vsel %vm838, %v337, 0
    %v1036 = vsel %vm838, %v342, 0
    %1038 = vmatprep.subr.mxu0 0.0
    %1039 = vmatpush1.xpose.msra.mxu0 %v1027
    %1040 = vmatprep.subr.mxu0 0.0
    %1041 = vmatpush1.xpose.msra.mxu0 %v1030
    %1042 = vmatprep.subr.mxu0 0.0
    %1043 = vmatpush1.xpose.msra.mxu0 %v1033
    %1044 = vmatprep.subr.mxu0 0.0
    %1045 = vmatpush1.xpose.msra.mxu0 %v1036
    %1046 = vmatprep.subr.mxu0 0.0
    %1047 = vmatpush1.xpose.msra.mxu0 0.0
    %1048 = vmatprep.subr.mxu0 0.0
    %1049 = vmatpush1.xpose.msra.mxu0 0.0
    %1050 = vmatprep.subr.mxu0 0.0
    %1051 = vmatpush1.xpose.msra.mxu0 0.0
    %1052 = vmatprep.subr.mxu0 0.0
    %1053 = vmatpush1.xpose.msra.mxu0 0.0
    %1054 = vmatprep.subr.mxu0 0.0
    %1055 = vmatpush1.xpose.msra.mxu0 0.0
    %1056 = vmatprep.subr.mxu0 0.0
    %1057 = vmatpush1.xpose.msra.mxu0 0.0
    %1058 = vmatprep.subr.mxu0 0.0
    %1059 = vmatpush1.xpose.msra.mxu0 0.0
    %1060 = vmatprep.subr.mxu0 0.0
    %1061 = vmatpush1.xpose.msra.mxu0 0.0
    %1062 = vmatprep.subr.mxu0 0.0
    %1063 = vmatpush1.xpose.msra.mxu0 0.0
    %1064 = vmatprep.subr.mxu0 0.0
    %1065 = vmatpush1.xpose.msra.mxu0 0.0
    %1066 = vmatprep.subr.mxu0 0.0
    %1067 = vmatpush1.xpose.msra.mxu0 0.0
    %1068 = vmatprep.subr.mxu0 0.0
    %1069 = vmatpush1.xpose.msra.mxu0 0.0
    %1070 = vmatprep.subr.mxu0 0.0
    %1071 = vmatpush1.xpose.msra.mxu0 0.0
    %1072 = vmatprep.subr.mxu0 0.0
    %1073 = vmatpush1.xpose.msra.mxu0 0.0
    %1074 = vmatprep.subr.mxu0 0.0
    %1075 = vmatpush1.xpose.msra.mxu0 0.0
    %1076 = vmatprep.subr.mxu0 0.0
    %1077 = vmatpush1.xpose.msra.mxu0 0.0
    %1078 = vmatprep.subr.mxu0 0.0
    %1079 = vmatpush1.xpose.msra.mxu0 0.0
    %1080 = vmatprep.subr.mxu0 0.0
    %1081 = vmatpush1.xpose.msra.mxu0 0.0
    %1082 = vmatprep.subr.mxu0 0.0
    %1083 = vmatpush1.xpose.msra.mxu0 0.0
    %1084 = vmatprep.subr.mxu0 0.0
    %1085 = vmatpush1.xpose.msra.mxu0 0.0
    %1086 = vmatprep.subr.mxu0 0.0
    %1087 = vmatpush1.xpose.msra.mxu0 0.0
    %1088 = vmatprep.subr.mxu0 0.0
    %1089 = vmatpush1.xpose.msra.mxu0 0.0
    %1090 = vmatprep.subr.mxu0 0.0
    %1091 = vmatpush1.xpose.msra.mxu0 0.0
    %1092 = vmatprep.subr.mxu0 0.0
    %1093 = vmatpush1.xpose.msra.mxu0 0.0
    %1094 = vmatprep.subr.mxu0 0.0
    %1095 = vmatpush1.xpose.msra.mxu0 0.0
    %1096 = vmatprep.subr.mxu0 0.0
    %1097 = vmatpush1.xpose.msra.mxu0 0.0
    %1098 = vmatprep.subr.mxu0 0.0
    %1099 = vmatpush1.xpose.msra.mxu0 0.0
    %1100 = vmatprep.subr.mxu0 0.0
    %1101 = vmatpush1.xpose.msra.mxu0 0.0
    %1102 = vmatprep.mubr.f32.mxu0 0.0
    %1103 = vmatmul.mubr.f32.gmra.mrb[0].mxu0 %v1021
    %v1104 = vpop.f32.mrb[0].mxu0
    %v1105 = vadd.f32 0.0, %v1104
    %v1106 = vpop.f32.mrb[0].mxu0
    %1107 = vmatprep.mubr.f32.mxu0 0.0
    %1108 = vmatmul.mubr.f32.gmra.mrb[0].mxu0 %v1024
    %v1109 = vpop.f32.mrb[0].mxu0
    %v1110 = vadd.f32 0.0, %v1109
    %v1111 = vpop.f32.mrb[0].mxu0
    %1112 = vdwg.mxu0
    %v1114 = vsel %vm838, %v923, 0
    %v1117 = vsel %vm838, %v924, 0
    %v1120 = vsel %vm838, %v347, 0
    %v1123 = vsel %vm838, %v352, 0
    %v1126 = vsel %vm838, %v357, 0
    %v1129 = vsel %vm838, %v362, 0
    %1131 = vmatprep.subr.mxu0 0.0
    %1132 = vmatpush1.xpose.msra.mxu0 %v1120
    %1133 = vmatprep.subr.mxu0 0.0
    %1134 = vmatpush1.xpose.msra.mxu0 %v1123
    %1135 = vmatprep.subr.mxu0 0.0
    %1136 = vmatpush1.xpose.msra.mxu0 %v1126
    %1137 = vmatprep.subr.mxu0 0.0
    %1138 = vmatpush1.xpose.msra.mxu0 %v1129
    %1139 = vmatprep.subr.mxu0 0.0
    %1140 = vmatpush1.xpose.msra.mxu0 0.0
    %1141 = vmatprep.subr.mxu0 0.0
    %1142 = vmatpush1.xpose.msra.mxu0 0.0
    %1143 = vmatprep.subr.mxu0 0.0
    %1144 = vmatpush1.xpose.msra.mxu0 0.0
    %1145 = vmatprep.subr.mxu0 0.0
    %1146 = vmatpush1.xpose.msra.mxu0 0.0
    %1147 = vmatprep.subr.mxu0 0.0
    %1148 = vmatpush1.xpose.msra.mxu0 0.0
    %1149 = vmatprep.subr.mxu0 0.0
    %1150 = vmatpush1.xpose.msra.mxu0 0.0
    %1151 = vmatprep.subr.mxu0 0.0
    %1152 = vmatpush1.xpose.msra.mxu0 0.0
    %1153 = vmatprep.subr.mxu0 0.0
    %1154 = vmatpush1.xpose.msra.mxu0 0.0
    %1155 = vmatprep.subr.mxu0 0.0
    %1156 = vmatpush1.xpose.msra.mxu0 0.0
    %1157 = vmatprep.subr.mxu0 0.0
    %1158 = vmatpush1.xpose.msra.mxu0 0.0
    %1159 = vmatprep.subr.mxu0 0.0
    %1160 = vmatpush1.xpose.msra.mxu0 0.0
    %1161 = vmatprep.subr.mxu0 0.0
    %1162 = vmatpush1.xpose.msra.mxu0 0.0
    %1163 = vmatprep.subr.mxu0 0.0
    %1164 = vmatpush1.xpose.msra.mxu0 0.0
    %1165 = vmatprep.subr.mxu0 0.0
    %1166 = vmatpush1.xpose.msra.mxu0 0.0
    %1167 = vmatprep.subr.mxu0 0.0
    %1168 = vmatpush1.xpose.msra.mxu0 0.0
    %1169 = vmatprep.subr.mxu0 0.0
    %1170 = vmatpush1.xpose.msra.mxu0 0.0
    %1171 = vmatprep.subr.mxu0 0.0
    %1172 = vmatpush1.xpose.msra.mxu0 0.0
    %1173 = vmatprep.subr.mxu0 0.0
    %1174 = vmatpush1.xpose.msra.mxu0 0.0
    %1175 = vmatprep.subr.mxu0 0.0
    %1176 = vmatpush1.xpose.msra.mxu0 0.0
    %1177 = vmatprep.subr.mxu0 0.0
    %1178 = vmatpush1.xpose.msra.mxu0 0.0
    %1179 = vmatprep.subr.mxu0 0.0
    %1180 = vmatpush1.xpose.msra.mxu0 0.0
    %1181 = vmatprep.subr.mxu0 0.0
    %1182 = vmatpush1.xpose.msra.mxu0 0.0
    %1183 = vmatprep.subr.mxu0 0.0
    %1184 = vmatpush1.xpose.msra.mxu0 0.0
    %1185 = vmatprep.subr.mxu0 0.0
    %1186 = vmatpush1.xpose.msra.mxu0 0.0
    %1187 = vmatprep.subr.mxu0 0.0
    %1188 = vmatpush1.xpose.msra.mxu0 0.0
    %1189 = vmatprep.subr.mxu0 0.0
    %1190 = vmatpush1.xpose.msra.mxu0 0.0
    %1191 = vmatprep.subr.mxu0 0.0
    %1192 = vmatpush1.xpose.msra.mxu0 0.0
    %1193 = vmatprep.subr.mxu0 0.0
    %1194 = vmatpush1.xpose.msra.mxu0 0.0
    %1195 = vmatprep.mubr.f32.mxu0 0.0
    %1196 = vmatmul.mubr.f32.gmra.mrb[0].mxu0 %v1114
    %v1197 = vpop.f32.mrb[0].mxu0
    %v1198 = vadd.f32 0.0, %v1197
    %v1199 = vpop.f32.mrb[0].mxu0
    %1200 = vmatprep.mubr.f32.mxu0 0.0
    %1201 = vmatmul.mubr.f32.gmra.mrb[0].mxu0 %v1117
    %v1202 = vpop.f32.mrb[0].mxu0
    %v1203 = vadd.f32 0.0, %v1202
    %v1204 = vpop.f32.mrb[0].mxu0
    %1205 = vdwg.mxu0
    %v1207 = vsel %vm838, %v925, 0
    %v1210 = vsel %vm838, %v926, 0
    %v1213 = vsel %vm838, %v367, 0
    %v1216 = vsel %vm838, %v372, 0
    %v1219 = vsel %vm838, %v377, 0
    %v1222 = vsel %vm838, %v382, 0
    %1224 = vmatprep.subr.mxu0 0.0
    %1225 = vmatpush1.xpose.msra.mxu0 %v1213
    %1226 = vmatprep.subr.mxu0 0.0
    %1227 = vmatpush1.xpose.msra.mxu0 %v1216
    %1228 = vmatprep.subr.mxu0 0.0
    %1229 = vmatpush1.xpose.msra.mxu0 %v1219
    %1230 = vmatprep.subr.mxu0 0.0
    %1231 = vmatpush1.xpose.msra.mxu0 %v1222
    %1232 = vmatprep.subr.mxu0 0.0
    %1233 = vmatpush1.xpose.msra.mxu0 0.0
    %1234 = vmatprep.subr.mxu0 0.0
    %1235 = vmatpush1.xpose.msra.mxu0 0.0
    %1236 = vmatprep.subr.mxu0 0.0
    %1237 = vmatpush1.xpose.msra.mxu0 0.0
    %1238 = vmatprep.subr.mxu0 0.0
    %1239 = vmatpush1.xpose.msra.mxu0 0.0
    %1240 = vmatprep.subr.mxu0 0.0
    %1241 = vmatpush1.xpose.msra.mxu0 0.0
    %1242 = vmatprep.subr.mxu0 0.0
    %1243 = vmatpush1.xpose.msra.mxu0 0.0
    %1244 = vmatprep.subr.mxu0 0.0
    %1245 = vmatpush1.xpose.msra.mxu0 0.0
    %1246 = vmatprep.subr.mxu0 0.0
    %1247 = vmatpush1.xpose.msra.mxu0 0.0
    %1248 = vmatprep.subr.mxu0 0.0
    %1249 = vmatpush1.xpose.msra.mxu0 0.0
    %1250 = vmatprep.subr.mxu0 0.0
    %1251 = vmatpush1.xpose.msra.mxu0 0.0
    %1252 = vmatprep.subr.mxu0 0.0
    %1253 = vmatpush1.xpose.msra.mxu0 0.0
    %1254 = vmatprep.subr.mxu0 0.0
    %1255 = vmatpush1.xpose.msra.mxu0 0.0
    %1256 = vmatprep.subr.mxu0 0.0
    %1257 = vmatpush1.xpose.msra.mxu0 0.0
    %1258 = vmatprep.subr.mxu0 0.0
    %1259 = vmatpush1.xpose.msra.mxu0 0.0
    %1260 = vmatprep.subr.mxu0 0.0
    %1261 = vmatpush1.xpose.msra.mxu0 0.0
    %1262 = vmatprep.subr.mxu0 0.0
    %1263 = vmatpush1.xpose.msra.mxu0 0.0
    %1264 = vmatprep.subr.mxu0 0.0
    %1265 = vmatpush1.xpose.msra.mxu0 0.0
    %1266 = vmatprep.subr.mxu0 0.0
    %1267 = vmatpush1.xpose.msra.mxu0 0.0
    %1268 = vmatprep.subr.mxu0 0.0
    %1269 = vmatpush1.xpose.msra.mxu0 0.0
    %1270 = vmatprep.subr.mxu0 0.0
    %1271 = vmatpush1.xpose.msra.mxu0 0.0
    %1272 = vmatprep.subr.mxu0 0.0
    %1273 = vmatpush1.xpose.msra.mxu0 0.0
    %1274 = vmatprep.subr.mxu0 0.0
    %1275 = vmatpush1.xpose.msra.mxu0 0.0
    %1276 = vmatprep.subr.mxu0 0.0
    %1277 = vmatpush1.xpose.msra.mxu0 0.0
    %1278 = vmatprep.subr.mxu0 0.0
    %1279 = vmatpush1.xpose.msra.mxu0 0.0
    %1280 = vmatprep.subr.mxu0 0.0
    %1281 = vmatpush1.xpose.msra.mxu0 0.0
    %1282 = vmatprep.subr.mxu0 0.0
    %1283 = vmatpush1.xpose.msra.mxu0 0.0
    %1284 = vmatprep.subr.mxu0 0.0
    %1285 = vmatpush1.xpose.msra.mxu0 0.0
    %1286 = vmatprep.subr.mxu0 0.0
    %1287 = vmatpush1.xpose.msra.mxu0 0.0
    %1288 = vmatprep.mubr.f32.mxu0 0.0
    %1289 = vmatmul.mubr.f32.gmra.mrb[0].mxu0 %v1207
    %v1290 = vpop.f32.mrb[0].mxu0
    %v1291 = vadd.f32 0.0, %v1290
    %v1292 = vpop.f32.mrb[0].mxu0
    %1293 = vmatprep.mubr.f32.mxu0 0.0
    %1294 = vmatmul.mubr.f32.gmra.mrb[0].mxu0 %v1210
    %v1295 = vpop.f32.mrb[0].mxu0
    %v1296 = vadd.f32 0.0, %v1295
    %v1297 = vpop.f32.mrb[0].mxu0
    %1298 = vdwg.mxu0
    %v1299 = vsel %vm106, %v1012, 0.0
    %v1300 = vsel %vm106, %v1105, 0.0
    %v1301 = vadd.f32 %v1299, %v1300
    %v1302 = vsel %vm106, %v1198, 0.0
    %v1303 = vadd.f32 %v1301, %v1302
    %v1304 = vsel %vm106, %v1291, 0.0
    %v1305 = vadd.f32 %v1303, %v1304
    %v1306 = vsel %vm106, %v1017, 0.0
    %v1307 = vsel %vm106, %v1110, 0.0
    %v1308 = vadd.f32 %v1306, %v1307
    %v1309 = vsel %vm106, %v1203, 0.0
    %v1310 = vadd.f32 %v1308, %v1309
    %v1311 = vsel %vm106, %v1296, 0.0
    %v1312 = vadd.f32 %v1310, %v1311
    %v1313 = vadd.f32 %v40, %v1305
    %v1314 = vadd.f32 %v41, %v1312
    %v1315 = vmul.f32 %v1313, %v1313
    %v1316 = vmul.f32 %v1314, %v1314
    %v1317 = vsel %vm106, %v1315, 0.0
    %1318 = vadd.xlane.f32.xlu0 %v1317
    %v1319 = vpop.xlane.xlu0 %1318
    %v1320 = vsel %vm106, %v1316, 0.0
    %1321 = vadd.xlane.f32.xlu0 %v1320
    %v1322 = vpop.xlane.xlu0 %1321
    %v1323 = vmul.f32 %v1319, %v113
    %v1324 = vmul.f32 %v1322, %v113
    %v1325 = vadd.f32 %v1323, 1e-06
    %v1326 = vadd.f32 %v1324, 1e-06
    %v1327 = vrsqrt.pop %v1325
    %v1328 = vrsqrt.pop %v1326
    %v1329 = vmul.f32 %v1313, %v1327
    %v1330 = vmul.f32 %v1314, %v1328
    %v1332 = vsel %vm106, %v1329, 0
    %v1335 = vsel %vm106, %v1330, 0
    %1337 = vmatprep.subr.mxu0 0.0
    %1338 = vmatpush1.msra.mxu0 %v90
    %1339 = vmatprep.subr.mxu0 0.0
    %1340 = vmatpush1.msra.mxu0 %v91
    %1341 = vmatprep.subr.mxu0 0.0
    %1342 = vmatpush1.msra.mxu0 %v92
    %1343 = vmatprep.subr.mxu0 0.0
    %1344 = vmatpush1.msra.mxu0 %v93
    %1345 = vmatprep.subr.mxu0 0.0
    %1346 = vmatpush1.msra.mxu0 0.0
    %1347 = vmatprep.subr.mxu0 0.0
    %1348 = vmatpush1.msra.mxu0 0.0
    %1349 = vmatprep.subr.mxu0 0.0
    %1350 = vmatpush1.msra.mxu0 0.0
    %1351 = vmatprep.subr.mxu0 0.0
    %1352 = vmatpush1.msra.mxu0 0.0
    %1353 = vmatprep.subr.mxu0 0.0
    %1354 = vmatpush1.msra.mxu0 0.0
    %1355 = vmatprep.subr.mxu0 0.0
    %1356 = vmatpush1.msra.mxu0 0.0
    %1357 = vmatprep.subr.mxu0 0.0
    %1358 = vmatpush1.msra.mxu0 0.0
    %1359 = vmatprep.subr.mxu0 0.0
    %1360 = vmatpush1.msra.mxu0 0.0
    %1361 = vmatprep.subr.mxu0 0.0
    %1362 = vmatpush1.msra.mxu0 0.0
    %1363 = vmatprep.subr.mxu0 0.0
    %1364 = vmatpush1.msra.mxu0 0.0
    %1365 = vmatprep.subr.mxu0 0.0
    %1366 = vmatpush1.msra.mxu0 0.0
    %1367 = vmatprep.subr.mxu0 0.0
    %1368 = vmatpush1.msra.mxu0 0.0
    %1369 = vmatprep.subr.mxu0 0.0
    %1370 = vmatpush1.msra.mxu0 0.0
    %1371 = vmatprep.subr.mxu0 0.0
    %1372 = vmatpush1.msra.mxu0 0.0
    %1373 = vmatprep.subr.mxu0 0.0
    %1374 = vmatpush1.msra.mxu0 0.0
    %1375 = vmatprep.subr.mxu0 0.0
    %1376 = vmatpush1.msra.mxu0 0.0
    %1377 = vmatprep.subr.mxu0 0.0
    %1378 = vmatpush1.msra.mxu0 0.0
    %1379 = vmatprep.subr.mxu0 0.0
    %1380 = vmatpush1.msra.mxu0 0.0
    %1381 = vmatprep.subr.mxu0 0.0
    %1382 = vmatpush1.msra.mxu0 0.0
    %1383 = vmatprep.subr.mxu0 0.0
    %1384 = vmatpush1.msra.mxu0 0.0
    %1385 = vmatprep.subr.mxu0 0.0
    %1386 = vmatpush1.msra.mxu0 0.0
    %1387 = vmatprep.subr.mxu0 0.0
    %1388 = vmatpush1.msra.mxu0 0.0
    %1389 = vmatprep.subr.mxu0 0.0
    %1390 = vmatpush1.msra.mxu0 0.0
    %1391 = vmatprep.subr.mxu0 0.0
    %1392 = vmatpush1.msra.mxu0 0.0
    %1393 = vmatprep.subr.mxu0 0.0
    %1394 = vmatpush1.msra.mxu0 0.0
    %1395 = vmatprep.subr.mxu0 0.0
    %1396 = vmatpush1.msra.mxu0 0.0
    %1397 = vmatprep.subr.mxu0 0.0
    %1398 = vmatpush1.msra.mxu0 0.0
    %1399 = vmatprep.subr.mxu0 0.0
    %1400 = vmatpush1.msra.mxu0 0.0
    %1401 = vmatprep.mubr.f32.mxu0 0.0
    %1402 = vmatmul.mubr.f32.gmra.mrb[0].mxu0 %v1332
    %v1403 = vpop.f32.mrb[0].mxu0
    %v1404 = vadd.f32 0.0, %v1403
    %v1405 = vpop.f32.mrb[0].mxu0
    %1406 = vmatprep.mubr.f32.mxu0 0.0
    %1407 = vmatmul.mubr.f32.gmra.mrb[0].mxu0 %v1335
    %v1408 = vpop.f32.mrb[0].mxu0
    %v1409 = vadd.f32 0.0, %v1408
    %v1410 = vpop.f32.mrb[0].mxu0
    %1411 = vdwg.mxu0
    %v1412 = vxor.u32 %v1404, 2147483648
    %v1413 = vxor.u32 %v1409, 2147483648
    %v1414 = vmul.f32 %v1412, 1.442695
    %v1415 = vpow.pop %v1414
    %v1416 = vmul.f32 %v1413, 1.442695
    %v1417 = vpow.pop %v1416
    %v1418 = vadd.f32 %v1415, 1.0
    %v1419 = vadd.f32 %v1417, 1.0
    %v1420 = vrcp.pop %v1418
    %v1421 = vmul.f32 1.0, %v1420
    %v1422 = vrcp.pop %v1419
    %v1423 = vmul.f32 1.0, %v1422
    %v1424 = vmul.f32 %v1404, %v1421
    %v1425 = vmul.f32 %v1409, %v1423
    %1428 = vrot.lane.b32.xlu0 %v1404, 64
    %v1429 = vpop.permute.xlu0 %1428
    %1430 = vrot.lane.b32.xlu0 %v1409, 64
    %v1431 = vpop.permute.xlu0 %1430
    %v1434 = vmul.f32 %v1424, %v1429
    %v1435 = vmul.f32 %v1425, %v1431
    %vm1436 = vcmask 523264
    %v1438 = vsel %vm1436, %v1434, 0
    %v1441 = vsel %vm1436, %v1435, 0
    %1443 = vmatprep.subr.mxu0 0.0
    %1444 = vmatpush1.msra.mxu0 %v94
    %1445 = vmatprep.subr.mxu0 0.0
    %1446 = vmatpush1.msra.mxu0 %v95
    %1447 = vmatprep.subr.mxu0 0.0
    %1448 = vmatpush1.msra.mxu0 %v96
    %1449 = vmatprep.subr.mxu0 0.0
    %1450 = vmatpush1.msra.mxu0 %v97
    %1451 = vmatprep.subr.mxu0 0.0
    %1452 = vmatpush1.msra.mxu0 %v98
    %1453 = vmatprep.subr.mxu0 0.0
    %1454 = vmatpush1.msra.mxu0 %v99
    %1455 = vmatprep.subr.mxu0 0.0
    %1456 = vmatpush1.msra.mxu0 %v100
    %1457 = vmatprep.subr.mxu0 0.0
    %1458 = vmatpush1.msra.mxu0 %v101
    %1459 = vmatprep.subr.mxu0 0.0
    %1460 = vmatpush1.msra.mxu0 0.0
    %1461 = vmatprep.subr.mxu0 0.0
    %1462 = vmatpush1.msra.mxu0 0.0
    %1463 = vmatprep.subr.mxu0 0.0
    %1464 = vmatpush1.msra.mxu0 0.0
    %1465 = vmatprep.subr.mxu0 0.0
    %1466 = vmatpush1.msra.mxu0 0.0
    %1467 = vmatprep.subr.mxu0 0.0
    %1468 = vmatpush1.msra.mxu0 0.0
    %1469 = vmatprep.subr.mxu0 0.0
    %1470 = vmatpush1.msra.mxu0 0.0
    %1471 = vmatprep.subr.mxu0 0.0
    %1472 = vmatpush1.msra.mxu0 0.0
    %1473 = vmatprep.subr.mxu0 0.0
    %1474 = vmatpush1.msra.mxu0 0.0
    %1475 = vmatprep.subr.mxu0 0.0
    %1476 = vmatpush1.msra.mxu0 0.0
    %1477 = vmatprep.subr.mxu0 0.0
    %1478 = vmatpush1.msra.mxu0 0.0
    %1479 = vmatprep.subr.mxu0 0.0
    %1480 = vmatpush1.msra.mxu0 0.0
    %1481 = vmatprep.subr.mxu0 0.0
    %1482 = vmatpush1.msra.mxu0 0.0
    %1483 = vmatprep.subr.mxu0 0.0
    %1484 = vmatpush1.msra.mxu0 0.0
    %1485 = vmatprep.subr.mxu0 0.0
    %1486 = vmatpush1.msra.mxu0 0.0
    %1487 = vmatprep.subr.mxu0 0.0
    %1488 = vmatpush1.msra.mxu0 0.0
    %1489 = vmatprep.subr.mxu0 0.0
    %1490 = vmatpush1.msra.mxu0 0.0
    %1491 = vmatprep.subr.mxu0 0.0
    %1492 = vmatpush1.msra.mxu0 0.0
    %1493 = vmatprep.subr.mxu0 0.0
    %1494 = vmatpush1.msra.mxu0 0.0
    %1495 = vmatprep.subr.mxu0 0.0
    %1496 = vmatpush1.msra.mxu0 0.0
    %1497 = vmatprep.subr.mxu0 0.0
    %1498 = vmatpush1.msra.mxu0 0.0
    %1499 = vmatprep.subr.mxu0 0.0
    %1500 = vmatpush1.msra.mxu0 0.0
    %1501 = vmatprep.subr.mxu0 0.0
    %1502 = vmatpush1.msra.mxu0 0.0
    %1503 = vmatprep.subr.mxu0 0.0
    %1504 = vmatpush1.msra.mxu0 0.0
    %1505 = vmatprep.subr.mxu0 0.0
    %1506 = vmatpush1.msra.mxu0 0.0
    %1507 = vmatprep.mubr.f32.mxu0 0.0
    %1508 = vmatmul.mubr.f32.gmra.mrb[0].mxu0 %v1438
    %v1509 = vpop.f32.mrb[0].mxu0
    %v1510 = vadd.f32 0.0, %v1509
    %v1511 = vpop.f32.mrb[0].mxu0
    %1512 = vmatprep.mubr.f32.mxu0 0.0
    %1513 = vmatmul.mubr.f32.gmra.mrb[0].mxu0 %v1441
    %v1514 = vpop.f32.mrb[0].mxu0
    %v1515 = vadd.f32 0.0, %v1514
    %v1516 = vpop.f32.mrb[0].mxu0
    %1517 = vdwg.mxu0
    %v1518 = vadd.f32 %v1313, %v1510
    %v1519 = vadd.f32 %v1314, %v1515
    %1520 = vst.msk [vmem:[#allocation7] sm:$0xff] %vm106, %v1518
    %1521 = vst.msk [vmem:[#allocation7 + $0x8] sm:$0xff] %vm106, %v1519
    // Predicated region
    $region18: #{tpu_custom_call.1} parent=1 // pred_check
      _
    $region19: #{tpu_custom_call.1} parent=1 // pred_check_branch
      %1523 = sbr.rel (0) target = $region21
    $region20: #{tpu_custom_call.1} parent=1 // pred_region
      %s1525 = ssub.s32 256, 256
      %1526 = vsyncadd [#allocation4], %s1525
      %s1527 = sshll.u32 [#allocation7], 4
      %s1528 = int_to_ptr.vmem [resolvable:$true] %s1527
      %1533 = dma.vmem_to_hbm [thread:$0]  %s1528, 256, %s2, [#allocation4], 128, 128, 8
    $region21: #{tpu_custom_call.1} parent=1 // pred_fallthru
      _
    // Predicated region
    $region22: #{tpu_custom_call.1} parent=1 // pred_check
      _
    $region23: #{tpu_custom_call.1} parent=1 // pred_check_branch
      %1535 = sbr.rel (0) target = $region25
    $region24: #{tpu_custom_call.1} parent=1 // pred_region
      %1536 = dma.done [#allocation4], 256
    $region25: #{tpu_custom_call.1} parent=1 // pred_fallthru
      _
    %1537 = vsyncpa [#allocation3], 1
    %1538 = vsyncpa [#allocation6], 1
    %1539 = vsyncpa [#allocation4], 1

</llo_original>
